<compile_context>
chip_gen: v5e
topology: v5e:2x2
jax: 0.10.0
libtpu: 0.0.40
codegen_flags: <defaults>
</compile_context>

<pallas_src>
import math

import jax
import jax.numpy as jnp
from jax.experimental import pallas as pl
from jax.experimental.pallas import tpu as pltpu


_VMEM_LIMIT = 32 * 1024 * 1024  # explicit scoped-VMEM budget (safe on v5e/v6e/v7x)


# ---------------------------------------------------------------------------
# Fused kernel: per-batch K/V projection (cached in VMEM scratch) +
# 1-head cross-attention + RMSNorm + residual + SwiGLU + RMSNorm + residual
# ---------------------------------------------------------------------------
def _make_coa_kernel(E, H, recompute_kv):
    scale = 1.0 / math.sqrt(E)
    eps = 1e-6

    def kernel(kv_ref, q_ref, wkv_ref, wq_ref, wo_ref, w12_ref, b12_ref,
               w3_ref, consts_ref, o_ref, kT_sc, v_sc):
        # ---- K/V projection into VMEM scratch (once per batch) ----
        def _project_kv():
            kvp = jnp.dot(kv_ref[0], wkv_ref[...],
                          preferred_element_type=jnp.float32)        # (Lkv, 2E)
            k = kvp[:, :E]                                            # (Lkv, E) f32
            v = kvp[:, E:]                                            # (Lkv, E) f32
            kT_sc[...] = k.T.astype(kT_sc.dtype)                      # (E, Lkv) bf16
            v_sc[...] = v.astype(v_sc.dtype)                          # (Lkv, E) bf16

        if recompute_kv:
            _project_kv()                       # q-tile axis is parallel (B == 1)
        else:
            pl.when(pl.program_id(1) == 0)(_project_kv)

        q_f32 = q_ref[0]                                              # (TQ, E) f32 residual
        q_bf = q_f32.astype(jnp.bfloat16)

        # ---- single-head attention (dropout = identity in eval mode) ----
        qp = jnp.dot(q_bf, wq_ref[...],
                     preferred_element_type=jnp.float32) * scale      # scale folded here
        s = jnp.dot(qp.astype(jnp.bfloat16), kT_sc[...],
                    preferred_element_type=jnp.float32)               # (TQ, Lkv)
        m = jnp.max(s, axis=-1, keepdims=True)
        p = jnp.exp(s - m)
        inv_den = pl.reciprocal(jnp.sum(p, axis=-1, keepdims=True), approx=True)
        p = p * inv_den
        ctx = jnp.dot(p.astype(jnp.bfloat16), v_sc[...],
                      preferred_element_type=jnp.float32)             # (TQ, E)
        att = jnp.dot(ctx.astype(jnp.bfloat16), wo_ref[...],
                      preferred_element_type=jnp.float32)             # (TQ, E)

        g1 = consts_ref[0:1, :]                                       # (1, E)
        g2 = consts_ref[1:2, :]
        b3 = consts_ref[2:3, :]

        # ---- RMSNorm1 + residual ----
        y1 = att * jax.lax.rsqrt(jnp.mean(att * att, axis=-1, keepdims=True) + eps)
        y1 = y1 * g1 + q_f32                                          # (TQ, E) f32

        # ---- SwiGLU FFN (W1 || W2 fused -> N = 2H) ----
        y1_bf = y1.astype(jnp.bfloat16)
        h12 = jnp.dot(y1_bf, w12_ref[...],
                      preferred_element_type=jnp.float32) + b12_ref[...]   # (TQ, 2H)
        h1 = h12[:, :H]
        h2 = h12[:, H:]
        h = (h1 * jax.nn.sigmoid(h1)) * h2                            # silu(h1) * h2
        f = jnp.dot(h.astype(jnp.bfloat16), w3_ref[...],
                    preferred_element_type=jnp.float32) + b3          # (TQ, E)

        # ---- RMSNorm2 + residual ----
        y2 = f * jax.lax.rsqrt(jnp.mean(f * f, axis=-1, keepdims=True) + eps)
        o_ref[0] = (y2 * g2 + y1).astype(o_ref.dtype)

    return kernel


# ---------------------------------------------------------------------------
# Host-side wrapper
# ---------------------------------------------------------------------------
def _row_tile(total, target):
    """Largest tile <= target that divides `total` and is a multiple of 8
    (or equals `total`)."""
    t = min(target, total)
    for cand in range(t, 0, -1):
        if total % cand == 0 and (cand % 8 == 0 or cand == total):
            return cand
    return total


def coa_forward(q, kv, params):
    """CoA forward.  q: (B, Lq, E), kv: (B, Lkv, E) -> (B, Lq, E) f32."""
    B, Lq, E = q.shape
    _, Lkv, _ = kv.shape
    H = params["w1"].shape[-1]

    # Fused / packed operands (done once on the host side).
    wq_bf = params["wq"].astype(jnp.bfloat16)                              # (E, E)
    wkv_bf = jnp.concatenate([params["wk"], params["wv"]], axis=1).astype(jnp.bfloat16)  # (E, 2E)
    wo_bf = params["wo"].astype(jnp.bfloat16)                              # (E, E)
    w12_bf = jnp.concatenate([params["w1"], params["w2"]], axis=1).astype(jnp.bfloat16)  # (E, 2H)
    b12 = jnp.concatenate([params["b1"], params["b2"]], axis=1).astype(jnp.float32)      # (1, 2H)
    w3_bf = params["w3"].astype(jnp.bfloat16)                              # (H, E)
    consts = jnp.concatenate(
        [params["g1"], params["g2"], params["b3"]], axis=0).astype(jnp.float32)          # (3, E)

    kv_bf = kv.astype(jnp.bfloat16)
    q_f32 = q.astype(jnp.float32)

    # ---- q-row tiling ----
    TQ = _row_tile(Lq, 512)
    nq = Lq // TQ
    recompute_kv = False
    if B == 1 and nq < 2 and Lq >= 16:
        # keep both v7x TensorCores busy: split the q axis instead of B
        TQ = _row_tile(Lq, max(8, Lq // 2))
        nq = Lq // TQ
    if B == 1 and nq >= 2:
        recompute_kv = True   # q-tile axis becomes parallel; K/V recomputed per tile

    kernel = _make_coa_kernel(E, H, recompute_kv)
    dims = ("parallel", "parallel" if recompute_kv else "arbitrary")

    out = pl.pallas_call(
        kernel,
        out_shape=jax.ShapeDtypeStruct((B, Lq, E), jnp.float32),
        grid=(B, nq),
        in_specs=[
            pl.BlockSpec((1, Lkv, E), lambda b, i: (b, 0, 0)),     # kv (bf16)
            pl.BlockSpec((1, TQ, E), lambda b, i: (b, i, 0)),      # q  (f32)
            pl.BlockSpec((E, 2 * E), lambda b, i: (0, 0)),         # Wk || Wv
            pl.BlockSpec((E, E), lambda b, i: (0, 0)),             # Wq
            pl.BlockSpec((E, E), lambda b, i: (0, 0)),             # Wo
            pl.BlockSpec((E, 2 * H), lambda b, i: (0, 0)),         # W1 || W2
            pl.BlockSpec((1, 2 * H), lambda b, i: (0, 0)),         # b1 || b2
            pl.BlockSpec((H, E), lambda b, i: (0, 0)),             # W3
            pl.BlockSpec((3, E), lambda b, i: (0, 0)),             # g1 ; g2 ; b3
        ],
        out_specs=pl.BlockSpec((1, TQ, E), lambda b, i: (b, i, 0)),
        scratch_shapes=[
            pltpu.VMEM((E, Lkv), jnp.bfloat16),                    # K^T (per batch)
            pltpu.VMEM((Lkv, E), jnp.bfloat16),                    # V   (per batch)
        ],
        compiler_params=pltpu.CompilerParams(
            dimension_semantics=dims,
            vmem_limit_bytes=_VMEM_LIMIT),
    )(kv_bf, q_f32, wkv_bf, wq_bf, wo_bf, w12_bf, b12, w3_bf, consts)
    return out


# ---------------------------------------------------------------------------
# Pure-JAX reference (f32 everywhere) for a correctness check
# ---------------------------------------------------------------------------
def coa_reference(q, kv, params):
    E = q.shape[-1]

    def rms(x, g):
        return x * jax.lax.rsqrt(jnp.mean(x * x, axis=-1, keepdims=True) + 1e-6) * g

    Q = q @ params["wq"]
    K = kv @ params["wk"]
    V = kv @ params["wv"]
    s = jnp.einsum("bqe,bke->bqk", Q, K) / jnp.sqrt(jnp.float32(E))
    p = jax.nn.softmax(s, axis=-1)
    att = jnp.einsum("bqk,bke->bqe", p, V) @ params["wo"]
    y1 = rms(att, params["g1"]) + q
    h1 = y1 @ params["w1"] + params["b1"]
    h2 = y1 @ params["w2"] + params["b2"]
    f = (jax.nn.silu(h1) * h2) @ params["w3"] + params["b3"]
    return rms(f, params["g2"]) + y1


# ---------------------------------------------------------------------------
# Deterministic parameter construction
# ---------------------------------------------------------------------------
def build_params(key, emb, hidden):
    ks = jax.random.split(key, 10)

    def lin(k, fan_in, fan_out):
        return jax.random.normal(k, (fan_in, fan_out), jnp.float32) / math.sqrt(fan_in)

    return {
        "wq": lin(ks[0], emb, emb),
        "wk": lin(ks[1], emb, emb),
        "wv": lin(ks[2], emb, emb),
        "wo": lin(ks[3], emb, emb),
        "g1": jnp.ones((1, emb), jnp.float32),
        "w1": lin(ks[4], emb, hidden),
        "b1": jax.random.normal(ks[5], (1, hidden), jnp.float32) * 0.02,
        "w2": lin(ks[6], emb, hidden),
        "b2": jax.random.normal(ks[7], (1, hidden), jnp.float32) * 0.02,
        "w3": lin(ks[8], hidden, emb),
        "b3": jax.random.normal(ks[9], (1, emb), jnp.float32) * 0.02,
        "g2": jnp.ones((1, emb), jnp.float32),
    }


if __name__ == "__main__":
    key = jax.random.PRNGKey(0)
    kq, kkv, kp = jax.random.split(key, 3)

    B, Lq, Lkv, E = 2, 64, 128, 128   # emb_dim=128 (module default, lane-dense)
    q = jax.random.normal(kq, (B, Lq, E), jnp.float32)
    kv = jax.random.normal(kkv, (B, Lkv, E), jnp.float32)
    params = build_params(kp, E, E)    # SwiGLU(emb_dim, emb_dim)

    out = coa_forward(q, kv, params)
    jax.block_until_ready(out)

    ref = coa_reference(q, kv, params)
    denom = jnp.maximum(jnp.max(jnp.abs(ref)), 1.0)
    rel_err = float(jnp.max(jnp.abs(out - ref)) / denom)

    assert out.shape == (B, Lq, E)
    assert rel_err < 5e-2, f"relative error too large: {rel_err}"
    print("KERNEL_OK")
</pallas_src>

<mosaic_0001>
module attributes {stable_mosaic.version = 11 : i64} {
  func.func @kernel(%arg0: i32, %arg1: i32, %arg2: memref<1x128x128xbf16, #tpu.memory_space<vmem>>, %arg3: memref<1x64x128xf32, #tpu.memory_space<vmem>>, %arg4: memref<128x256xbf16, #tpu.memory_space<vmem>>, %arg5: memref<128x128xbf16, #tpu.memory_space<vmem>>, %arg6: memref<128x128xbf16, #tpu.memory_space<vmem>>, %arg7: memref<128x256xbf16, #tpu.memory_space<vmem>>, %arg8: memref<1x256xf32, #tpu.memory_space<vmem>>, %arg9: memref<128x128xbf16, #tpu.memory_space<vmem>>, %arg10: memref<3x128xf32, #tpu.memory_space<vmem>>, %arg11: memref<1x64x128xf32, #tpu.memory_space<vmem>>, %arg12: memref<128x128xbf16, #tpu.memory_space<vmem>>, %arg13: memref<128x128xbf16, #tpu.memory_space<vmem>>) attributes {dimension_semantics = [#tpu.dimension_semantics<parallel>, #tpu.dimension_semantics<arbitrary>], iteration_bounds = array<i64: 2, 1>, scalar_prefetch = 0 : i64, scratch_operands = 2 : i64, tpu.core_type = #tpu.core_type<tc>, window_params = [{transform_indices = @transform_0, window_bounds = array<i64: 1, 128, 128>}, {transform_indices = @transform_1, window_bounds = array<i64: 1, 64, 128>}, {pipeline_mode = #tpu.pipeline_mode<synchronous>, transform_indices = @transform_2, window_bounds = array<i64: 128, 256>}, {pipeline_mode = #tpu.pipeline_mode<synchronous>, transform_indices = @transform_3, window_bounds = array<i64: 128, 128>}, {pipeline_mode = #tpu.pipeline_mode<synchronous>, transform_indices = @transform_4, window_bounds = array<i64: 128, 128>}, {pipeline_mode = #tpu.pipeline_mode<synchronous>, transform_indices = @transform_5, window_bounds = array<i64: 128, 256>}, {pipeline_mode = #tpu.pipeline_mode<synchronous>, transform_indices = @transform_6, window_bounds = array<i64: 1, 256>}, {pipeline_mode = #tpu.pipeline_mode<synchronous>, transform_indices = @transform_7, window_bounds = array<i64: 128, 128>}, {pipeline_mode = #tpu.pipeline_mode<synchronous>, transform_indices = @transform_8, window_bounds = array<i64: 3, 128>}, {transform_indices = @transform_9, window_bounds = array<i64: 1, 64, 128>}]} {
    %c0_i32 = arith.constant 0 : i32
    %0 = arith.cmpi eq, %arg1, %c0_i32 : i32
    %1 = arith.extui %0 : i1 to i32
    %c0_i32_0 = arith.constant 0 : i32
    %2 = arith.cmpi ne, %1, %c0_i32_0 : i32
    scf.if %2 {
      %c0_39 = arith.constant 0 : index
      %c0_40 = arith.constant 0 : index
      %c0_41 = arith.constant 0 : index
      %81 = vector.load %arg2[%c0_39, %c0_40, %c0_41] : memref<1x128x128xbf16, #tpu.memory_space<vmem>>, vector<1x128x128xbf16>
      %82 = vector.shape_cast %81 : vector<1x128x128xbf16> to vector<128x128xbf16>
      %c0_42 = arith.constant 0 : index
      %c0_43 = arith.constant 0 : index
      %83 = vector.load %arg4[%c0_42, %c0_43] : memref<128x256xbf16, #tpu.memory_space<vmem>>, vector<128x256xbf16>
      %cst_44 = arith.constant dense<0.000000e+00> : vector<128x256xf32>
      %84 = tpu.matmul %82, %83, %cst_44 {dimension_numbers = #tpu.dot_dimension_numbers<[1], [0], [0], [1], [0, 0, 1, 1], [], []>} : vector<128x128xbf16>, vector<128x256xbf16>, vector<128x256xf32> -> vector<128x256xf32>
      %85 = vector.extract_strided_slice %84 {offsets = [0, 0], sizes = [128, 128], strides = [1, 1]} : vector<128x256xf32> to vector<128x128xf32>
      %86 = vector.extract_strided_slice %84 {offsets = [0, 128], sizes = [128, 128], strides = [1, 1]} : vector<128x256xf32> to vector<128x128xf32>
      %87 = tpu.transpose %85, [1, 0] : vector<128x128xf32> -> vector<128x128xf32>
      %88 = arith.truncf %87 : vector<128x128xf32> to vector<128x128xbf16>
      %c0_45 = arith.constant 0 : index
      %c0_46 = arith.constant 0 : index
      %89 = vector.load %arg12[%c0_45, %c0_46] : memref<128x128xbf16, #tpu.memory_space<vmem>>, vector<128x128xbf16>
      tpu.vector_store %arg12[%c0_45, %c0_46], %88 {strides = array<i32>} : memref<128x128xbf16, #tpu.memory_space<vmem>>, vector<128x128xbf16>,
      %90 = arith.truncf %86 : vector<128x128xf32> to vector<128x128xbf16>
      %c0_47 = arith.constant 0 : index
      %c0_48 = arith.constant 0 : index
      %91 = vector.load %arg13[%c0_47, %c0_48] : memref<128x128xbf16, #tpu.memory_space<vmem>>, vector<128x128xbf16>
      tpu.vector_store %arg13[%c0_47, %c0_48], %90 {strides = array<i32>} : memref<128x128xbf16, #tpu.memory_space<vmem>>, vector<128x128xbf16>,
    } else {
    }
    %c0 = arith.constant 0 : index
    %c0_1 = arith.constant 0 : index
    %c0_2 = arith.constant 0 : index
    %3 = vector.load %arg3[%c0, %c0_1, %c0_2] : memref<1x64x128xf32, #tpu.memory_space<vmem>>, vector<1x64x128xf32>
    %4 = vector.shape_cast %3 : vector<1x64x128xf32> to vector<64x128xf32>
    %5 = arith.truncf %4 : vector<64x128xf32> to vector<64x128xbf16>
    %c0_3 = arith.constant 0 : index
    %c0_4 = arith.constant 0 : index
    %6 = vector.load %arg5[%c0_3, %c0_4] : memref<128x128xbf16, #tpu.memory_space<vmem>>, vector<128x128xbf16>
    %cst = arith.constant dense<0.000000e+00> : vector<64x128xf32>
    %7 = tpu.matmul %5, %6, %cst {dimension_numbers = #tpu.dot_dimension_numbers<[1], [0], [0], [1], [0, 0, 1, 1], [], []>} : vector<64x128xbf16>, vector<128x128xbf16>, vector<64x128xf32> -> vector<64x128xf32>
    %cst_5 = arith.constant 0.0883883461 : f32
    %8 = vector.broadcast %cst_5 : f32 to vector<64x128xf32>
    %9 = arith.mulf %7, %8 : vector<64x128xf32>
    %10 = arith.truncf %9 : vector<64x128xf32> to vector<64x128xbf16>
    %c0_6 = arith.constant 0 : index
    %c0_7 = arith.constant 0 : index
    %11 = vector.load %arg12[%c0_6, %c0_7] : memref<128x128xbf16, #tpu.memory_space<vmem>>, vector<128x128xbf16>
    %cst_8 = arith.constant dense<0.000000e+00> : vector<64x128xf32>
    %12 = tpu.matmul %10, %11, %cst_8 {dimension_numbers = #tpu.dot_dimension_numbers<[1], [0], [0], [1], [0, 0, 1, 1], [], []>} : vector<64x128xbf16>, vector<128x128xbf16>, vector<64x128xf32> -> vector<64x128xf32>
    %cst_9 = arith.constant dense<0xFF800000> : vector<64xf32>
    %13 = vector.multi_reduction <maximumf>, %12, %cst_9 [1] : vector<64x128xf32> to vector<64xf32>
    %14 = vector.shape_cast %13 : vector<64xf32> to vector<64x1xf32>
    %15 = vector.broadcast %14 : vector<64x1xf32> to vector<64x128xf32>
    %16 = arith.subf %12, %15 : vector<64x128xf32>
    %17 = math.exp %16 : vector<64x128xf32>
    %cst_10 = arith.constant dense<0.000000e+00> : vector<64xf32>
    %18 = vector.multi_reduction <add>, %17, %cst_10 [1] : vector<64x128xf32> to vector<64xf32>
    %19 = vector.shape_cast %18 : vector<64xf32> to vector<64x1xf32>
    %20 = tpu.reciprocal %19 {approx = true} : vector<64x1xf32> -> vector<64x1xf32>
    %21 = vector.broadcast %20 : vector<64x1xf32> to vector<64x128xf32>
    %22 = arith.mulf %17, %21 : vector<64x128xf32>
    %23 = arith.truncf %22 : vector<64x128xf32> to vector<64x128xbf16>
    %c0_11 = arith.constant 0 : index
    %c0_12 = arith.constant 0 : index
    %24 = vector.load %arg13[%c0_11, %c0_12] : memref<128x128xbf16, #tpu.memory_space<vmem>>, vector<128x128xbf16>
    %cst_13 = arith.constant dense<0.000000e+00> : vector<64x128xf32>
    %25 = tpu.matmul %23, %24, %cst_13 {dimension_numbers = #tpu.dot_dimension_numbers<[1], [0], [0], [1], [0, 0, 1, 1], [], []>} : vector<64x128xbf16>, vector<128x128xbf16>, vector<64x128xf32> -> vector<64x128xf32>
    %26 = arith.truncf %25 : vector<64x128xf32> to vector<64x128xbf16>
    %c0_14 = arith.constant 0 : index
    %c0_15 = arith.constant 0 : index
    %27 = vector.load %arg6[%c0_14, %c0_15] : memref<128x128xbf16, #tpu.memory_space<vmem>>, vector<128x128xbf16>
    %cst_16 = arith.constant dense<0.000000e+00> : vector<64x128xf32>
    %28 = tpu.matmul %26, %27, %cst_16 {dimension_numbers = #tpu.dot_dimension_numbers<[1], [0], [0], [1], [0, 0, 1, 1], [], []>} : vector<64x128xbf16>, vector<128x128xbf16>, vector<64x128xf32> -> vector<64x128xf32>
    %c0_17 = arith.constant 0 : index
    %c0_18 = arith.constant 0 : index
    %29 = vector.load %arg10[%c0_17, %c0_18] : memref<3x128xf32, #tpu.memory_space<vmem>>, vector<1x128xf32>
    %c1 = arith.constant 1 : index
    %c0_19 = arith.constant 0 : index
    %30 = vector.load %arg10[%c1, %c0_19] : memref<3x128xf32, #tpu.memory_space<vmem>>, vector<1x128xf32>
    %c2 = arith.constant 2 : index
    %c0_20 = arith.constant 0 : index
    %31 = vector.load %arg10[%c2, %c0_20] : memref<3x128xf32, #tpu.memory_space<vmem>>, vector<1x128xf32>
    %32 = arith.mulf %28, %28 : vector<64x128xf32>
    %cst_21 = arith.constant dense<0.000000e+00> : vector<64xf32>
    %33 = vector.multi_reduction <add>, %32, %cst_21 [1] : vector<64x128xf32> to vector<64xf32>
    %34 = vector.shape_cast %33 : vector<64xf32> to vector<64x1xf32>
    %cst_22 = arith.constant 1.280000e+02 : f32
    %35 = vector.broadcast %cst_22 : f32 to vector<64x1xf32>
    %36 = arith.divf %34, %35 : vector<64x1xf32>
    %cst_23 = arith.constant 9.99999997E-7 : f32
    %37 = vector.broadcast %cst_23 : f32 to vector<64x1xf32>
    %38 = arith.addf %36, %37 : vector<64x1xf32>
    %39 = math.rsqrt %38 : vector<64x1xf32>
    %40 = vector.broadcast %39 : vector<64x1xf32> to vector<64x128xf32>
    %41 = arith.mulf %28, %40 : vector<64x128xf32>
    %42 = vector.broadcast %29 : vector<1x128xf32> to vector<64x128xf32>
    %43 = arith.mulf %41, %42 : vector<64x128xf32>
    %44 = arith.addf %43, %4 : vector<64x128xf32>
    %45 = arith.truncf %44 : vector<64x128xf32> to vector<64x128xbf16>
    %c0_24 = arith.constant 0 : index
    %c0_25 = arith.constant 0 : index
    %46 = vector.load %arg7[%c0_24, %c0_25] : memref<128x256xbf16, #tpu.memory_space<vmem>>, vector<128x256xbf16>
    %cst_26 = arith.constant dense<0.000000e+00> : vector<64x256xf32>
    %47 = tpu.matmul %45, %46, %cst_26 {dimension_numbers = #tpu.dot_dimension_numbers<[1], [0], [0], [1], [0, 0, 1, 1], [], []>} : vector<64x128xbf16>, vector<128x256xbf16>, vector<64x256xf32> -> vector<64x256xf32>
    %c0_27 = arith.constant 0 : index
    %c0_28 = arith.constant 0 : index
    %48 = vector.load %arg8[%c0_27, %c0_28] : memref<1x256xf32, #tpu.memory_space<vmem>>, vector<1x256xf32>
    %49 = vector.broadcast %48 : vector<1x256xf32> to vector<64x256xf32>
    %50 = arith.addf %47, %49 : vector<64x256xf32>
    %51 = vector.extract_strided_slice %50 {offsets = [0, 0], sizes = [64, 128], strides = [1, 1]} : vector<64x256xf32> to vector<64x128xf32>
    %52 = vector.extract_strided_slice %50 {offsets = [0, 128], sizes = [64, 128], strides = [1, 1]} : vector<64x256xf32> to vector<64x128xf32>
    %53 = arith.negf %51 : vector<64x128xf32>
    %54 = math.exp %53 : vector<64x128xf32>
    %cst_29 = arith.constant 1.000000e+00 : f32
    %55 = vector.broadcast %cst_29 : f32 to vector<64x128xf32>
    %56 = arith.addf %55, %54 : vector<64x128xf32>
    %57 = arith.divf %55, %56 : vector<64x128xf32>
    %58 = arith.mulf %51, %57 : vector<64x128xf32>
    %59 = arith.mulf %58, %52 : vector<64x128xf32>
    %60 = arith.truncf %59 : vector<64x128xf32> to vector<64x128xbf16>
    %c0_30 = arith.constant 0 : index
    %c0_31 = arith.constant 0 : index
    %61 = vector.load %arg9[%c0_30, %c0_31] : memref<128x128xbf16, #tpu.memory_space<vmem>>, vector<128x128xbf16>
    %cst_32 = arith.constant dense<0.000000e+00> : vector<64x128xf32>
    %62 = tpu.matmul %60, %61, %cst_32 {dimension_numbers = #tpu.dot_dimension_numbers<[1], [0], [0], [1], [0, 0, 1, 1], [], []>} : vector<64x128xbf16>, vector<128x128xbf16>, vector<64x128xf32> -> vector<64x128xf32>
    %63 = vector.broadcast %31 : vector<1x128xf32> to vector<64x128xf32>
    %64 = arith.addf %62, %63 : vector<64x128xf32>
    %65 = arith.mulf %64, %64 : vector<64x128xf32>
    %cst_33 = arith.constant dense<0.000000e+00> : vector<64xf32>
    %66 = vector.multi_reduction <add>, %65, %cst_33 [1] : vector<64x128xf32> to vector<64xf32>
    %67 = vector.shape_cast %66 : vector<64xf32> to vector<64x1xf32>
    %cst_34 = arith.constant 1.280000e+02 : f32
    %68 = vector.broadcast %cst_34 : f32 to vector<64x1xf32>
    %69 = arith.divf %67, %68 : vector<64x1xf32>
    %cst_35 = arith.constant 9.99999997E-7 : f32
    %70 = vector.broadcast %cst_35 : f32 to vector<64x1xf32>
    %71 = arith.addf %69, %70 : vector<64x1xf32>
    %72 = math.rsqrt %71 : vector<64x1xf32>
    %73 = vector.broadcast %72 : vector<64x1xf32> to vector<64x128xf32>
    %74 = arith.mulf %64, %73 : vector<64x128xf32>
    %75 = vector.broadcast %30 : vector<1x128xf32> to vector<64x128xf32>
    %76 = arith.mulf %74, %75 : vector<64x128xf32>
    %77 = arith.addf %76, %44 : vector<64x128xf32>
    %c0_36 = arith.constant 0 : index
    %c0_37 = arith.constant 0 : index
    %c0_38 = arith.constant 0 : index
    %78 = vector.load %arg11[%c0_36, %c0_37, %c0_38] : memref<1x64x128xf32, #tpu.memory_space<vmem>>, vector<1x64x128xf32>
    %79 = vector.shape_cast %78 : vector<1x64x128xf32> to vector<64x128xf32>
    %80 = vector.shape_cast %77 : vector<64x128xf32> to vector<1x64x128xf32>
    tpu.vector_store %arg11[%c0_36, %c0_37, %c0_38], %80 {strides = array<i32>} : memref<1x64x128xf32, #tpu.memory_space<vmem>>, vector<1x64x128xf32>,
    return
  }
  func.func @transform_0(%arg0: i32, %arg1: i32) -> (i32, i32, i32) {
    %c0_i32 = arith.constant 0 : i32
    %c0_i32_0 = arith.constant 0 : i32
    %c0_i32_1 = arith.constant 0 : i32
    return %arg0, %c0_i32, %c0_i32_0 : i32, i32, i32
  }
  func.func @transform_1(%arg0: i32, %arg1: i32) -> (i32, i32, i32) {
    %c0_i32 = arith.constant 0 : i32
    %c0_i32_0 = arith.constant 0 : i32
    return %arg0, %arg1, %c0_i32 : i32, i32, i32
  }
  func.func @transform_2(%arg0: i32, %arg1: i32) -> (i32, i32) {
    %c0_i32 = arith.constant 0 : i32
    %c0_i32_0 = arith.constant 0 : i32
    %c0_i32_1 = arith.constant 0 : i32
    return %c0_i32, %c0_i32_0 : i32, i32
  }
  func.func @transform_3(%arg0: i32, %arg1: i32) -> (i32, i32) {
    %c0_i32 = arith.constant 0 : i32
    %c0_i32_0 = arith.constant 0 : i32
    %c0_i32_1 = arith.constant 0 : i32
    return %c0_i32, %c0_i32_0 : i32, i32
  }
  func.func @transform_4(%arg0: i32, %arg1: i32) -> (i32, i32) {
    %c0_i32 = arith.constant 0 : i32
    %c0_i32_0 = arith.constant 0 : i32
    %c0_i32_1 = arith.constant 0 : i32
    return %c0_i32, %c0_i32_0 : i32, i32
  }
  func.func @transform_5(%arg0: i32, %arg1: i32) -> (i32, i32) {
    %c0_i32 = arith.constant 0 : i32
    %c0_i32_0 = arith.constant 0 : i32
    %c0_i32_1 = arith.constant 0 : i32
    return %c0_i32, %c0_i32_0 : i32, i32
  }
  func.func @transform_6(%arg0: i32, %arg1: i32) -> (i32, i32) {
    %c0_i32 = arith.constant 0 : i32
    %c0_i32_0 = arith.constant 0 : i32
    %c0_i32_1 = arith.constant 0 : i32
    return %c0_i32, %c0_i32_0 : i32, i32
  }
  func.func @transform_7(%arg0: i32, %arg1: i32) -> (i32, i32) {
    %c0_i32 = arith.constant 0 : i32
    %c0_i32_0 = arith.constant 0 : i32
    %c0_i32_1 = arith.constant 0 : i32
    return %c0_i32, %c0_i32_0 : i32, i32
  }
  func.func @transform_8(%arg0: i32, %arg1: i32) -> (i32, i32) {
    %c0_i32 = arith.constant 0 : i32
    %c0_i32_0 = arith.constant 0 : i32
    %c0_i32_1 = arith.constant 0 : i32
    return %c0_i32, %c0_i32_0 : i32, i32
  }
  func.func @transform_9(%arg0: i32, %arg1: i32) -> (i32, i32, i32) {
    %c0_i32 = arith.constant 0 : i32
    %c0_i32_0 = arith.constant 0 : i32
    return %arg0, %arg1, %c0_i32 : i32, i32, i32
  }
}

</mosaic_0001>

<llo_original>
// kernel: tpu_custom_call.1
$region0: #{tpu_custom_call.1}
  #allocation0 [shape = 'u32[]', space=smem, size = 0x4, offset = 0x4, fixed_abs, tag = 'smem constant byte address 0x4 - core index']
  #allocation1 [shape = 'u32[72,128]{1,0:T(1,128)}', space=vmem, size = 0x9000, scoped, tag = 'internal scratch']
  #allocation2 [shape = 'bf16[128,128]{1,0:T(8,128)(2,1)}', space=vmem, size = 0x8000, scoped, tag = 'scratch operand']
  #allocation3 [shape = 'bf16[128,128]{1,0:T(8,128)(2,1)}', space=vmem, size = 0x8000, scoped, tag = 'scratch operand']
  %s0 = inlined_call_operand.hbm [shape: bf16[2,128,128], index: 0, kind: input, shape index: {}]
  %s1 = inlined_call_operand.hbm [shape: f32[2,64,128], index: 1, kind: input, shape index: {}]
  %s2 = inlined_call_operand.hbm [shape: bf16[128,256], index: 2, kind: input, shape index: {}]
  %s3 = inlined_call_operand.hbm [shape: bf16[128,128], index: 3, kind: input, shape index: {}]
  %s4 = inlined_call_operand.hbm [shape: bf16[128,128], index: 4, kind: input, shape index: {}]
  %s5 = inlined_call_operand.hbm [shape: bf16[128,256], index: 5, kind: input, shape index: {}]
  %s6 = inlined_call_operand.vmem [shape: f32[1,256], index: 6, kind: input, shape index: {}]
  %s7 = inlined_call_operand.hbm [shape: bf16[128,128], index: 7, kind: input, shape index: {}]
  %s8 = inlined_call_operand.vmem [shape: f32[3,128], index: 8, kind: input, shape index: {}]
  %s9 = inlined_call_operand.hbm [shape: f32[2,64,128], index: 9, kind: output, shape index: {}]
  %s10 = sld [smem:[#allocation0]]
  $region101: #{tpu_custom_call.1} parent=0
    _
  %s12 = ssub.s32 1, %s10
  %s13 = scalar_select 0, %s12, %s10
  $region1: #{tpu_custom_call.1} parent=0
    #allocation4 [shape = 'u8[65536]{0}', space=vmem, size = 0x10000, scoped, tag = 'input window, operand 0']
    #allocation5 [shape = 's32[2]{0}', space=sflag, size = 0x8, scoped, tag = 'scoped memory for tpu_custom_call.1']
    #allocation6 [shape = 's32[2]{0}', space=sflag, size = 0x8, scoped, tag = 'scoped memory for tpu_custom_call.1']
    #allocation7 [shape = 'u8[65536]{0}', space=vmem, size = 0x10000, scoped, tag = 'input window, operand 1']
    #allocation8 [shape = 's32[2]{0}', space=sflag, size = 0x8, scoped, tag = 'scoped memory for tpu_custom_call.1']
    #allocation9 [shape = 'u8[65536]{0}', space=vmem, size = 0x10000, scoped, tag = 'input window, operand 2, single buffered']
    #allocation10 [shape = 'u8[32768]{0}', space=vmem, size = 0x8000, scoped, tag = 'input window, operand 3, single buffered']
    #allocation11 [shape = 's32[1]{0}', space=sflag, size = 0x4, scoped, tag = 'scoped memory for tpu_custom_call.1']
    #allocation12 [shape = 'u8[32768]{0}', space=vmem, size = 0x8000, scoped, tag = 'input window, operand 4, single buffered']
    #allocation13 [shape = 'u8[65536]{0}', space=vmem, size = 0x10000, scoped, tag = 'input window, operand 5, single buffered']
    #allocation14 [shape = 's32[1]{0}', space=sflag, size = 0x4, scoped, tag = 'scoped memory for tpu_custom_call.1']
    #allocation15 [shape = 'u8[32768]{0}', space=vmem, size = 0x8000, scoped, tag = 'input window, operand 7, single buffered']
    #allocation16 [shape = 'u8[65536]{0}', space=vmem, size = 0x10000, scoped, tag = 'output window, operand 0']
    %14 = vsyncpa [#allocation5], 0
    %s15 = scalar_lea.sflag [#allocation5], 1
    %16 = vsyncpa %s15, 0
    %17 = vsyncpa [#allocation8], 0
    %s18 = scalar_lea.sflag [#allocation8], 1
    %19 = vsyncpa %s18, 0
    %20 = vsyncpa [#allocation11], 0
    %21 = vsyncpa [#allocation14], 0
    %22 = vsyncpa [#allocation6], 0
    %s23 = scalar_lea.sflag [#allocation6], 1
    %24 = vsyncpa %s23, 0
    loop: start=0, step=1, limit=4
    $region2: #{tpu_custom_call.1} parent=1 // loop_pre_header
      _
    $region3: #{tpu_custom_call.1} parent=1 // loop_header
      %s26 = sphi 0, %s30
      %p27 = scmp.ge.s32.totalorder %s26, 4
      %s33 = sphi 0, %s45
      %s34 = sphi 0, %s41
      %s35 = sphi 0, %s33
      %s36 = sphi 0, %s34
      %s37 = sphi 0, %s35
      %s38 = sphi 0, %s36
      %s48 = sphi 0, %s50
      %s51 = sphi 0, %s48
      %s52 = sphi 0, %s51
      %s68 = sphi 0, %s52
      %s76 = sphi 0, %s78
      %s79 = sphi 0, %s76
      %s80 = sphi 0, %s79
      %s96 = sphi 0, %s80
      %s100 = sphi 0, %s100
      %s102 = sphi 0, %s100
      %s103 = sphi 0, %s102
      %s117 = sphi 0, %s103
      %s121 = sphi 0, %s121
      %s123 = sphi 0, %s121
      %s124 = sphi 0, %s123
      %s138 = sphi 0, %s124
      %s142 = sphi 0, %s142
      %s144 = sphi 0, %s142
      %s145 = sphi 0, %s144
      %s159 = sphi 0, %s145
      %s163 = sphi 0, %s163
      %s165 = sphi 0, %s163
      %s166 = sphi 0, %s165
      %s180 = sphi 0, %s166
      %s184 = sphi 0, %s184
      %s186 = sphi 0, %s184
      %s187 = sphi 0, %s186
      %s201 = sphi 0, %s187
      %s205 = sphi 0, %s205
      %s207 = sphi 0, %s205
      %s208 = sphi 0, %s207
      %s222 = sphi 0, %s208
      %s226 = sphi 0, %s226
      %s228 = sphi 0, %s226
      %s229 = sphi 0, %s228
      %s243 = sphi 0, %s229
      %s251 = sphi 0, %s253
      %s254 = sphi 0, %s251
      %s255 = sphi 0, %s254
      %s271 = sphi 0, %s255
    $region4: #{tpu_custom_call.1} parent=1 // loop_header_branch
      %29 = sbr.rel (%p27) target = $region8
    $region5: #{tpu_custom_call.1} parent=1 // loop_body
      %s31 = ssub.s32 %s26, 1
      %s32 = ssub.s32 %s26, 2
      %s39 = sadd.s32 1, %s34
      %p40 = scmp.ge.s32.totalorder %s39, 1
      %s41 = scalar_select %p40, 0, %s39
      %s42 = sadd.s32 1, %s33
      %s43 = scalar_select %p40, %s42, %s33
      %p44 = scmp.ge.s32.totalorder %s43, 2
      %s45 = scalar_select %p44, 0, %s43
      %s46 = ssub.s32 %s33, %s45
      %p47 = scmp.eq.s32.totalorder %s46, 0
      %s49 = sadd.s32 %s48, 1
      %s50 = scalar_select %p47, %s48, %s49
      %p53 = pneg %p47
      %p54 = scmp.eq.s32.totalorder %s26, 1
      %p55 = por %p53, %p54
      %p56 = scmp.ne.s32.totalorder %s48, %s51
      %p57 = scmp.eq.s32.totalorder %s26, 0
      %p58 = por %p56, %p57
      %p59 = scmp.ne.s32.totalorder %s48, %s51
      %p60 = scmp.eq.s32.totalorder %s31, 1
      %p61 = por %p59, %p60
      %p62 = scmp.ne.s32.totalorder %s51, %s52
      %p63 = scmp.eq.s32.totalorder %s31, 0
      %p64 = por %p62, %p63
      %p65 = scmp.ne.s32.totalorder %s51, %s52
      %p66 = scmp.eq.s32.totalorder %s32, 1
      %p67 = por %p65, %p66
      %p69 = scmp.ne.s32.totalorder %s52, %s68
      %p70 = scmp.eq.s32.totalorder %s32, 0
      %p71 = por %p69, %p70
      %s72 = ssub.s32 %s33, %s45
      %s73 = ssub.s32 %s34, %s41
      %s74 = sor.u32 %s72, %s73
      %p75 = scmp.eq.s32.totalorder %s74, 0
      %s77 = sadd.s32 %s76, 1
      %s78 = scalar_select %p75, %s76, %s77
      %p81 = pneg %p75
      %p82 = scmp.eq.s32.totalorder %s26, 1
      %p83 = por %p81, %p82
      %p84 = scmp.ne.s32.totalorder %s76, %s79
      %p85 = scmp.eq.s32.totalorder %s26, 0
      %p86 = por %p84, %p85
      %p87 = scmp.ne.s32.totalorder %s76, %s79
      %p88 = scmp.eq.s32.totalorder %s31, 1
      %p89 = por %p87, %p88
      %p90 = scmp.ne.s32.totalorder %s79, %s80
      %p91 = scmp.eq.s32.totalorder %s31, 0
      %p92 = por %p90, %p91
      %p93 = scmp.ne.s32.totalorder %s79, %s80
      %p94 = scmp.eq.s32.totalorder %s32, 1
      %p95 = por %p93, %p94
      %p97 = scmp.ne.s32.totalorder %s80, %s96
      %p98 = scmp.eq.s32.totalorder %s32, 0
      %p99 = por %p97, %p98
      %s101 = sadd.s32 %s100, 1
      %p104 = scmp.eq.s32.totalorder %s26, 1
      %p105 = scmp.ne.s32.totalorder %s100, %s102
      %p106 = scmp.eq.s32.totalorder %s26, 0
      %p107 = por %p105, %p106
      %p108 = scmp.ne.s32.totalorder %s100, %s102
      %p109 = scmp.eq.s32.totalorder %s31, 1
      %p110 = por %p108, %p109
      %p111 = scmp.ne.s32.totalorder %s102, %s103
      %p112 = scmp.eq.s32.totalorder %s31, 0
      %p113 = por %p111, %p112
      %p114 = scmp.ne.s32.totalorder %s102, %s103
      %p115 = scmp.eq.s32.totalorder %s32, 1
      %p116 = por %p114, %p115
      %p118 = scmp.ne.s32.totalorder %s103, %s117
      %p119 = scmp.eq.s32.totalorder %s32, 0
      %p120 = por %p118, %p119
      %s122 = sadd.s32 %s121, 1
      %p125 = scmp.eq.s32.totalorder %s26, 1
      %p126 = scmp.ne.s32.totalorder %s121, %s123
      %p127 = scmp.eq.s32.totalorder %s26, 0
      %p128 = por %p126, %p127
      %p129 = scmp.ne.s32.totalorder %s121, %s123
      %p130 = scmp.eq.s32.totalorder %s31, 1
      %p131 = por %p129, %p130
      %p132 = scmp.ne.s32.totalorder %s123, %s124
      %p133 = scmp.eq.s32.totalorder %s31, 0
      %p134 = por %p132, %p133
      %p135 = scmp.ne.s32.totalorder %s123, %s124
      %p136 = scmp.eq.s32.totalorder %s32, 1
      %p137 = por %p135, %p136
      %p139 = scmp.ne.s32.totalorder %s124, %s138
      %p140 = scmp.eq.s32.totalorder %s32, 0
      %p141 = por %p139, %p140
      %s143 = sadd.s32 %s142, 1
      %p146 = scmp.eq.s32.totalorder %s26, 1
      %p147 = scmp.ne.s32.totalorder %s142, %s144
      %p148 = scmp.eq.s32.totalorder %s26, 0
      %p149 = por %p147, %p148
      %p150 = scmp.ne.s32.totalorder %s142, %s144
      %p151 = scmp.eq.s32.totalorder %s31, 1
      %p152 = por %p150, %p151
      %p153 = scmp.ne.s32.totalorder %s144, %s145
      %p154 = scmp.eq.s32.totalorder %s31, 0
      %p155 = por %p153, %p154
      %p156 = scmp.ne.s32.totalorder %s144, %s145
      %p157 = scmp.eq.s32.totalorder %s32, 1
      %p158 = por %p156, %p157
      %p160 = scmp.ne.s32.totalorder %s145, %s159
      %p161 = scmp.eq.s32.totalorder %s32, 0
      %p162 = por %p160, %p161
      %s164 = sadd.s32 %s163, 1
      %p167 = scmp.eq.s32.totalorder %s26, 1
      %p168 = scmp.ne.s32.totalorder %s163, %s165
      %p169 = scmp.eq.s32.totalorder %s26, 0
      %p170 = por %p168, %p169
      %p171 = scmp.ne.s32.totalorder %s163, %s165
      %p172 = scmp.eq.s32.totalorder %s31, 1
      %p173 = por %p171, %p172
      %p174 = scmp.ne.s32.totalorder %s165, %s166
      %p175 = scmp.eq.s32.totalorder %s31, 0
      %p176 = por %p174, %p175
      %p177 = scmp.ne.s32.totalorder %s165, %s166
      %p178 = scmp.eq.s32.totalorder %s32, 1
      %p179 = por %p177, %p178
      %p181 = scmp.ne.s32.totalorder %s166, %s180
      %p182 = scmp.eq.s32.totalorder %s32, 0
      %p183 = por %p181, %p182
      %s185 = sadd.s32 %s184, 1
      %p188 = scmp.eq.s32.totalorder %s26, 1
      %p189 = scmp.ne.s32.totalorder %s184, %s186
      %p190 = scmp.eq.s32.totalorder %s26, 0
      %p191 = por %p189, %p190
      %p192 = scmp.ne.s32.totalorder %s184, %s186
      %p193 = scmp.eq.s32.totalorder %s31, 1
      %p194 = por %p192, %p193
      %p195 = scmp.ne.s32.totalorder %s186, %s187
      %p196 = scmp.eq.s32.totalorder %s31, 0
      %p197 = por %p195, %p196
      %p198 = scmp.ne.s32.totalorder %s186, %s187
      %p199 = scmp.eq.s32.totalorder %s32, 1
      %p200 = por %p198, %p199
      %p202 = scmp.ne.s32.totalorder %s187, %s201
      %p203 = scmp.eq.s32.totalorder %s32, 0
      %p204 = por %p202, %p203
      %s206 = sadd.s32 %s205, 1
      %p209 = scmp.eq.s32.totalorder %s26, 1
      %p210 = scmp.ne.s32.totalorder %s205, %s207
      %p211 = scmp.eq.s32.totalorder %s26, 0
      %p212 = por %p210, %p211
      %p213 = scmp.ne.s32.totalorder %s205, %s207
      %p214 = scmp.eq.s32.totalorder %s31, 1
      %p215 = por %p213, %p214
      %p216 = scmp.ne.s32.totalorder %s207, %s208
      %p217 = scmp.eq.s32.totalorder %s31, 0
      %p218 = por %p216, %p217
      %p219 = scmp.ne.s32.totalorder %s207, %s208
      %p220 = scmp.eq.s32.totalorder %s32, 1
      %p221 = por %p219, %p220
      %p223 = scmp.ne.s32.totalorder %s208, %s222
      %p224 = scmp.eq.s32.totalorder %s32, 0
      %p225 = por %p223, %p224
      %s227 = sadd.s32 %s226, 1
      %p230 = scmp.eq.s32.totalorder %s26, 1
      %p231 = scmp.ne.s32.totalorder %s226, %s228
      %p232 = scmp.eq.s32.totalorder %s26, 0
      %p233 = por %p231, %p232
      %p234 = scmp.ne.s32.totalorder %s226, %s228
      %p235 = scmp.eq.s32.totalorder %s31, 1
      %p236 = por %p234, %p235
      %p237 = scmp.ne.s32.totalorder %s228, %s229
      %p238 = scmp.eq.s32.totalorder %s31, 0
      %p239 = por %p237, %p238
      %p240 = scmp.ne.s32.totalorder %s228, %s229
      %p241 = scmp.eq.s32.totalorder %s32, 1
      %p242 = por %p240, %p241
      %p244 = scmp.ne.s32.totalorder %s229, %s243
      %p245 = scmp.eq.s32.totalorder %s32, 0
      %p246 = por %p244, %p245
      %s247 = ssub.s32 %s33, %s45
      %s248 = ssub.s32 %s34, %s41
      %s249 = sor.u32 %s247, %s248
      %p250 = scmp.eq.s32.totalorder %s249, 0
      %s252 = sadd.s32 %s251, 1
      %s253 = scalar_select %p250, %s251, %s252
      %p256 = pneg %p250
      %p257 = scmp.eq.s32.totalorder %s26, 1
      %p258 = por %p256, %p257
      %p259 = scmp.ne.s32.totalorder %s251, %s254
      %p260 = scmp.eq.s32.totalorder %s26, 0
      %p261 = por %p259, %p260
      %p262 = scmp.ne.s32.totalorder %s251, %s254
      %p263 = scmp.eq.s32.totalorder %s31, 1
      %p264 = por %p262, %p263
      %p265 = scmp.ne.s32.totalorder %s254, %s255
      %p266 = scmp.eq.s32.totalorder %s31, 0
      %p267 = por %p265, %p266
      %p268 = scmp.ne.s32.totalorder %s254, %s255
      %p269 = scmp.eq.s32.totalorder %s32, 1
      %p270 = por %p268, %p269
      %p272 = scmp.ne.s32.totalorder %s255, %s271
      %p273 = scmp.eq.s32.totalorder %s32, 0
      %p274 = por %p272, %p273
      %p275 = scmp.le.s32.totalorder 1, %s26
      %p276 = scmp.lt.s32.totalorder %s26, 3
      %p277 = pnand %p275, %p276
      %p278 = pneg %p277
      // Predicated region
      $region9: #{tpu_custom_call.1} parent=5 // pred_check
        _
      $region10: #{tpu_custom_call.1} parent=5 // pred_check_branch
        %280 = sbr.rel (%p277) target = $region12
      $region11: #{tpu_custom_call.1} parent=5 // pred_region
        %s281 = ssub.s32 %s26, 1
        // Predicated region
        $region13: #{tpu_custom_call.1} parent=11 // pred_check
          %p282 = pneg %p113
        $region14: #{tpu_custom_call.1} parent=11 // pred_check_branch
          %284 = sbr.rel (%p282) target = $region16
        $region15: #{tpu_custom_call.1} parent=11 // pred_region
          %286 = vsyncadd [#allocation8], 0
          %s287 = sshll.u32 %s2, 4
          %s288 = int_to_ptr.hbm [resolvable:$true] %s287
          %s289 = sshll.u32 [#allocation9], 4
          %s290 = int_to_ptr.vmem [resolvable:$true] %s289
          %295 = dma.hbm_to_vmem [thread:$0]  %s288, 2048, %s290, [#allocation8], 128, 128, 8
        $region16: #{tpu_custom_call.1} parent=11 // pred_fallthru
          _
        // Predicated region
        $region17: #{tpu_custom_call.1} parent=11 // pred_check
          %p296 = pneg %p134
        $region18: #{tpu_custom_call.1} parent=11 // pred_check_branch
          %298 = sbr.rel (%p296) target = $region20
        $region19: #{tpu_custom_call.1} parent=11 // pred_region
          %300 = vsyncadd [#allocation11], 0
          %s301 = sshll.u32 %s3, 4
          %s302 = int_to_ptr.hbm [resolvable:$true] %s301
          %s303 = sshll.u32 [#allocation10], 4
          %s304 = int_to_ptr.vmem [resolvable:$true] %s303
          %309 = dma.hbm_to_vmem [thread:$0]  %s302, 1024, %s304, [#allocation11], 64, 64, 4
        $region20: #{tpu_custom_call.1} parent=11 // pred_fallthru
          _
        // Predicated region
        $region21: #{tpu_custom_call.1} parent=11 // pred_check
          %p310 = pneg %p155
        $region22: #{tpu_custom_call.1} parent=11 // pred_check_branch
          %312 = sbr.rel (%p310) target = $region24
        $region23: #{tpu_custom_call.1} parent=11 // pred_region
          %314 = vsyncadd [#allocation11], 0
          %s315 = sshll.u32 %s4, 4
          %s316 = int_to_ptr.hbm [resolvable:$true] %s315
          %s317 = sshll.u32 [#allocation12], 4
          %s318 = int_to_ptr.vmem [resolvable:$true] %s317
          %323 = dma.hbm_to_vmem [thread:$0]  %s316, 1024, %s318, [#allocation11], 64, 64, 4
        $region24: #{tpu_custom_call.1} parent=11 // pred_fallthru
          _
        // Predicated region
        $region25: #{tpu_custom_call.1} parent=11 // pred_check
          %p324 = pneg %p176
        $region26: #{tpu_custom_call.1} parent=11 // pred_check_branch
          %326 = sbr.rel (%p324) target = $region28
        $region27: #{tpu_custom_call.1} parent=11 // pred_region
          %328 = vsyncadd [#allocation14], 0
          %s329 = sshll.u32 %s5, 4
          %s330 = int_to_ptr.hbm [resolvable:$true] %s329
          %s331 = sshll.u32 [#allocation13], 4
          %s332 = int_to_ptr.vmem [resolvable:$true] %s331
          %337 = dma.hbm_to_vmem [thread:$0]  %s330, 2048, %s332, [#allocation14], 128, 128, 8
        $region28: #{tpu_custom_call.1} parent=11 // pred_fallthru
          _
        // Predicated region
        $region29: #{tpu_custom_call.1} parent=11 // pred_check
          %p338 = pneg %p197
        $region30: #{tpu_custom_call.1} parent=11 // pred_check_branch
          %340 = sbr.rel (%p338) target = $region32
        $region31: #{tpu_custom_call.1} parent=11 // pred_region
          _
        $region32: #{tpu_custom_call.1} parent=11 // pred_fallthru
          _
        // Predicated region
        $region33: #{tpu_custom_call.1} parent=11 // pred_check
          %p341 = pneg %p218
        $region34: #{tpu_custom_call.1} parent=11 // pred_check_branch
          %343 = sbr.rel (%p341) target = $region36
        $region35: #{tpu_custom_call.1} parent=11 // pred_region
          %345 = vsyncadd [#allocation14], 0
          %s346 = sshll.u32 %s7, 4
          %s347 = int_to_ptr.hbm [resolvable:$true] %s346
          %s348 = sshll.u32 [#allocation15], 4
          %s349 = int_to_ptr.vmem [resolvable:$true] %s348
          %354 = dma.hbm_to_vmem [thread:$0]  %s347, 1024, %s349, [#allocation14], 64, 64, 4
        $region36: #{tpu_custom_call.1} parent=11 // pred_fallthru
          _
        // Predicated region
        $region37: #{tpu_custom_call.1} parent=11 // pred_check
          %p355 = pneg %p239
        $region38: #{tpu_custom_call.1} parent=11 // pred_check_branch
          %357 = sbr.rel (%p355) target = $region40
        $region39: #{tpu_custom_call.1} parent=11 // pred_region
          _
        $region40: #{tpu_custom_call.1} parent=11 // pred_fallthru
          _
      $region12: #{tpu_custom_call.1} parent=5 // pred_fallthru
        _
      %p358 = scmp.lt.s32.totalorder %s26, 2
      // Predicated region
      $region41: #{tpu_custom_call.1} parent=5 // pred_check
        %p359 = pneg %p358
      $region42: #{tpu_custom_call.1} parent=5 // pred_check_branch
        %361 = sbr.rel (%p359) target = $region44
      $region43: #{tpu_custom_call.1} parent=5 // pred_region
        // Predicated region
        $region45: #{tpu_custom_call.1} parent=43 // pred_check
          %p362 = pneg %p58
        $region46: #{tpu_custom_call.1} parent=43 // pred_check_branch
          %364 = sbr.rel (%p362) target = $region48
        $region47: #{tpu_custom_call.1} parent=43 // pred_region
          %s365 = sand.u32 %s48, 1
          %s366 = scalar_lea.sflag [#allocation5], %s365
          %s367 = sand.u32 %s48, 1
          %s368 = smul.addr %s367, 64
          %s369 = scalar_lea.vmem [#allocation4], %s368
          %371 = vsyncadd %s366, 0
          %s372 = smul.addr %s33, 16
          %s373 = smul.addr %s372, 4
          %s374 = scalar_lea.hbm %s0, %s373
          %s375 = sshll.u32 %s374, 4
          %s376 = int_to_ptr.hbm [resolvable:$true] %s375
          %s377 = sshll.u32 %s369, 4
          %s378 = int_to_ptr.vmem [resolvable:$true] %s377
          %383 = dma.hbm_to_vmem [thread:$0]  %s376, 1024, %s378, %s366, 64, 64, 4
        $region48: #{tpu_custom_call.1} parent=43 // pred_fallthru
          _
        // Predicated region
        $region49: #{tpu_custom_call.1} parent=43 // pred_check
          %p384 = pneg %p86
        $region50: #{tpu_custom_call.1} parent=43 // pred_check_branch
          %386 = sbr.rel (%p384) target = $region52
        $region51: #{tpu_custom_call.1} parent=43 // pred_region
          %s387 = sand.u32 %s26, 1
          %s388 = scalar_lea.sflag [#allocation8], %s387
          %s389 = sand.u32 %s76, 1
          %s390 = smul.addr %s389, 64
          %s391 = scalar_lea.vmem [#allocation7], %s390
          %s392 = smul.u32 8, %s34
          %394 = vsyncadd %s388, 0
          %s395 = smul.addr %s33, 8
          %s396 = sadd.s32 %s392, %s395
          %s397 = smul.addr %s396, 8
          %s398 = scalar_lea.hbm %s1, %s397
          %s399 = sshll.u32 %s398, 4
          %s400 = int_to_ptr.hbm [resolvable:$true] %s399
          %s401 = sshll.u32 %s391, 4
          %s402 = int_to_ptr.vmem [resolvable:$true] %s401
          %407 = dma.hbm_to_vmem [thread:$0]  %s400, 1024, %s402, %s388, 128, 128, 8
        $region52: #{tpu_custom_call.1} parent=43 // pred_fallthru
          _
      $region44: #{tpu_custom_call.1} parent=5 // pred_fallthru
        _
      %p408 = scmp.le.s32.totalorder 1, %s26
      %p409 = scmp.lt.s32.totalorder %s26, 3
      %p410 = pnand %p408, %p409
      %p411 = pneg %p410
      // Predicated region
      $region53: #{tpu_custom_call.1} parent=5 // pred_check
        _
      $region54: #{tpu_custom_call.1} parent=5 // pred_check_branch
        %413 = sbr.rel (%p410) target = $region56
      $region55: #{tpu_custom_call.1} parent=5 // pred_region
        %s414 = ssub.s32 %s26, 1
        %s415 = sand.u32 %s51, 1
        %s416 = scalar_lea.sflag [#allocation5], %s415
        %s417 = sand.u32 %s51, 1
        %s418 = smul.addr %s417, 64
        %s419 = scalar_lea.vmem [#allocation4], %s418
        // Predicated region
        $region57: #{tpu_custom_call.1} parent=55 // pred_check
          %p420 = pneg %p64
        $region58: #{tpu_custom_call.1} parent=55 // pred_check_branch
          %422 = sbr.rel (%p420) target = $region60
        $region59: #{tpu_custom_call.1} parent=55 // pred_region
          %424 = dma.done %s416, 1024
        $region60: #{tpu_custom_call.1} parent=55 // pred_fallthru
          _
        %s425 = sand.u32 %s31, 1
        %s426 = scalar_lea.sflag [#allocation8], %s425
        %s427 = sand.u32 %s79, 1
        %s428 = smul.addr %s427, 64
        %s429 = scalar_lea.vmem [#allocation7], %s428
        // Predicated region
        $region61: #{tpu_custom_call.1} parent=55 // pred_check
          %p430 = pneg %p92
        $region62: #{tpu_custom_call.1} parent=55 // pred_check_branch
          %432 = sbr.rel (%p430) target = $region64
        $region63: #{tpu_custom_call.1} parent=55 // pred_region
          %434 = dma.done %s426, 1024
        $region64: #{tpu_custom_call.1} parent=55 // pred_fallthru
          _
        // Predicated region
        $region65: #{tpu_custom_call.1} parent=55 // pred_check
          %p435 = pneg %p113
        $region66: #{tpu_custom_call.1} parent=55 // pred_check_branch
          %437 = sbr.rel (%p435) target = $region68
        $region67: #{tpu_custom_call.1} parent=55 // pred_region
          %439 = dma.done [#allocation8], 2048
        $region68: #{tpu_custom_call.1} parent=55 // pred_fallthru
          _
        // Predicated region
        $region69: #{tpu_custom_call.1} parent=55 // pred_check
          %p440 = pneg %p134
        $region70: #{tpu_custom_call.1} parent=55 // pred_check_branch
          %442 = sbr.rel (%p440) target = $region72
        $region71: #{tpu_custom_call.1} parent=55 // pred_region
          %444 = dma.done [#allocation11], 1024
        $region72: #{tpu_custom_call.1} parent=55 // pred_fallthru
          _
        // Predicated region
        $region73: #{tpu_custom_call.1} parent=55 // pred_check
          %p445 = pneg %p155
        $region74: #{tpu_custom_call.1} parent=55 // pred_check_branch
          %447 = sbr.rel (%p445) target = $region76
        $region75: #{tpu_custom_call.1} parent=55 // pred_region
          %449 = dma.done [#allocation11], 1024
        $region76: #{tpu_custom_call.1} parent=55 // pred_fallthru
          _
        // Predicated region
        $region77: #{tpu_custom_call.1} parent=55 // pred_check
          %p450 = pneg %p176
        $region78: #{tpu_custom_call.1} parent=55 // pred_check_branch
          %452 = sbr.rel (%p450) target = $region80
        $region79: #{tpu_custom_call.1} parent=55 // pred_region
          %454 = dma.done [#allocation14], 2048
        $region80: #{tpu_custom_call.1} parent=55 // pred_fallthru
          _
        // Predicated region
        $region81: #{tpu_custom_call.1} parent=55 // pred_check
          %p455 = pneg %p218
        $region82: #{tpu_custom_call.1} parent=55 // pred_check_branch
          %457 = sbr.rel (%p455) target = $region84
        $region83: #{tpu_custom_call.1} parent=55 // pred_region
          %459 = dma.done [#allocation14], 1024
        $region84: #{tpu_custom_call.1} parent=55 // pred_fallthru
          _
        %s460 = sand.u32 %s51, 1
        %s461 = scalar_lea.sflag [#allocation5], %s460
        %s462 = sand.u32 %s51, 1
        %s463 = smul.addr %s462, 64
        %s464 = scalar_lea.vmem [#allocation4], %s463
        %p465 = pneg %p64
        %p466 = pneg %p61
        %s467 = sand.u32 %s31, 1
        %s468 = scalar_lea.sflag [#allocation8], %s467
        %s469 = sand.u32 %s79, 1
        %s470 = smul.addr %s469, 64
        %s471 = scalar_lea.vmem [#allocation7], %s470
        %p472 = pneg %p92
        %p473 = pneg %p89
        %p474 = pneg %p113
        %p475 = pneg %p110
        %p476 = pneg %p134
        %p477 = pneg %p131
        %p478 = pneg %p155
        %p479 = pneg %p152
        %p480 = pneg %p176
        %p481 = pneg %p173
        %p482 = pneg %p197
        %p483 = pneg %p194
        %p484 = pneg %p218
        %p485 = pneg %p215
        %p486 = pneg %p239
        %p487 = pneg %p236
        %p488 = pneg %p267
        %p489 = pneg %p264
        %s490 = sand.u32 %s254, 1
        %s491 = scalar_lea.sflag [#allocation6], %s490
        %s492 = sand.u32 %s254, 1
        %s493 = smul.addr %s492, 64
        %s494 = scalar_lea.vmem [#allocation16], %s493
        %s495 = smul.u32 8, %s36
        %s496 = smul.u32 8, %s36
        %p497 = scmp.eq.s32.totalorder %s36, 0
        // Predicated region
        $region85: #{tpu_custom_call.1} parent=55 // pred_check
          %p498 = pneg %p497
        $region86: #{tpu_custom_call.1} parent=55 // pred_check_branch
          %500 = sbr.rel (%p498) target = $region88
        $region87: #{tpu_custom_call.1} parent=55 // pred_region
          %v501 = vld [vmem:[%s419] sm:$0xf]
          %v502 = vld [vmem:[%s419 + $0x4] sm:$0xf]
          %v503 = vld [vmem:[%s419 + $0x8] sm:$0xf]
          %v504 = vld [vmem:[%s419 + $0xc] sm:$0xf]
          %v505 = vld [vmem:[%s419 + $0x10] sm:$0xf]
          %v506 = vld [vmem:[%s419 + $0x14] sm:$0xf]
          %v507 = vld [vmem:[%s419 + $0x18] sm:$0xf]
          %v508 = vld [vmem:[%s419 + $0x1c] sm:$0xf]
          %v509 = vld [vmem:[%s419 + $0x20] sm:$0xf]
          %v510 = vld [vmem:[%s419 + $0x24] sm:$0xf]
          %v511 = vld [vmem:[%s419 + $0x28] sm:$0xf]
          %v512 = vld [vmem:[%s419 + $0x2c] sm:$0xf]
          %v513 = vld [vmem:[%s419 + $0x30] sm:$0xf]
          %v514 = vld [vmem:[%s419 + $0x34] sm:$0xf]
          %v515 = vld [vmem:[%s419 + $0x38] sm:$0xf]
          %v516 = vld [vmem:[%s419 + $0x3c] sm:$0xf]
          %v517 = vld [vmem:[#allocation9] sm:$0xff]
          %v518 = vld [vmem:[#allocation9 + $0x8] sm:$0xff]
          %v519 = vld [vmem:[#allocation9 + $0x10] sm:$0xff]
          %v520 = vld [vmem:[#allocation9 + $0x18] sm:$0xff]
          %v521 = vld [vmem:[#allocation9 + $0x20] sm:$0xff]
          %v522 = vld [vmem:[#allocation9 + $0x28] sm:$0xff]
          %v523 = vld [vmem:[#allocation9 + $0x30] sm:$0xff]
          %v524 = vld [vmem:[#allocation9 + $0x38] sm:$0xff]
          %v525 = vld [vmem:[#allocation9 + $0x40] sm:$0xff]
          %v526 = vld [vmem:[#allocation9 + $0x48] sm:$0xff]
          %v527 = vld [vmem:[#allocation9 + $0x50] sm:$0xff]
          %v528 = vld [vmem:[#allocation9 + $0x58] sm:$0xff]
          %v529 = vld [vmem:[#allocation9 + $0x60] sm:$0xff]
          %v530 = vld [vmem:[#allocation9 + $0x68] sm:$0xff]
          %v531 = vld [vmem:[#allocation9 + $0x70] sm:$0xff]
          %v532 = vld [vmem:[#allocation9 + $0x78] sm:$0xff]
          %v549 = vunpack.c.l.b16 %v501
          %v550 = vunpack.c.l.b16 %v502
          %v551 = vunpack.c.l.b16 %v503
          %v552 = vunpack.c.l.b16 %v504
          %v553 = vunpack.c.l.b16 %v505
          %v554 = vunpack.c.l.b16 %v506
          %v555 = vunpack.c.l.b16 %v507
          %v556 = vunpack.c.l.b16 %v508
          %v557 = vunpack.c.l.b16 %v509
          %v558 = vunpack.c.l.b16 %v510
          %v559 = vunpack.c.l.b16 %v511
          %v560 = vunpack.c.l.b16 %v512
          %v561 = vunpack.c.l.b16 %v513
          %v562 = vunpack.c.l.b16 %v514
          %v563 = vunpack.c.l.b16 %v515
          %v564 = vunpack.c.l.b16 %v516
          %v565 = vpack.c.b16 %v550, %v549
          %v566 = vpack.c.b16 %v552, %v551
          %v567 = vpack.c.b16 %v554, %v553
          %v568 = vpack.c.b16 %v556, %v555
          %v569 = vpack.c.b16 %v558, %v557
          %v570 = vpack.c.b16 %v560, %v559
          %v571 = vpack.c.b16 %v562, %v561
          %v572 = vpack.c.b16 %v564, %v563
          %v597 = vunpack.c.l.b16 %v517
          %v598 = vunpack.c.h.b16 %v517
          %v599 = vunpack.c.l.b16 %v518
          %v600 = vunpack.c.h.b16 %v518
          %v601 = vunpack.c.l.b16 %v519
          %v602 = vunpack.c.h.b16 %v519
          %v603 = vunpack.c.l.b16 %v520
          %v604 = vunpack.c.h.b16 %v520
          %v605 = vunpack.c.l.b16 %v521
          %v606 = vunpack.c.h.b16 %v521
          %v607 = vunpack.c.l.b16 %v522
          %v608 = vunpack.c.h.b16 %v522
          %v609 = vunpack.c.l.b16 %v523
          %v610 = vunpack.c.h.b16 %v523
          %v611 = vunpack.c.l.b16 %v524
          %v612 = vunpack.c.h.b16 %v524
          %v613 = vunpack.c.l.b16 %v525
          %v614 = vunpack.c.h.b16 %v525
          %v615 = vunpack.c.l.b16 %v526
          %v616 = vunpack.c.h.b16 %v526
          %v617 = vunpack.c.l.b16 %v527
          %v618 = vunpack.c.h.b16 %v527
          %v619 = vunpack.c.l.b16 %v528
          %v620 = vunpack.c.h.b16 %v528
          %v621 = vunpack.c.l.b16 %v529
          %v622 = vunpack.c.h.b16 %v529
          %v623 = vunpack.c.l.b16 %v530
          %v624 = vunpack.c.h.b16 %v530
          %v625 = vunpack.c.l.b16 %v531
          %v626 = vunpack.c.h.b16 %v531
          %v627 = vunpack.c.l.b16 %v532
          %v628 = vunpack.c.h.b16 %v532
          %v629 = vpack.c.b16 %v599, %v597
          %v630 = vpack.c.b16 %v600, %v598
          %v631 = vpack.c.b16 %v603, %v601
          %v632 = vpack.c.b16 %v604, %v602
          %v633 = vpack.c.b16 %v607, %v605
          %v634 = vpack.c.b16 %v608, %v606
          %v635 = vpack.c.b16 %v611, %v609
          %v636 = vpack.c.b16 %v612, %v610
          %v637 = vpack.c.b16 %v615, %v613
          %v638 = vpack.c.b16 %v616, %v614
          %v639 = vpack.c.b16 %v619, %v617
          %v640 = vpack.c.b16 %v620, %v618
          %v641 = vpack.c.b16 %v623, %v621
          %v642 = vpack.c.b16 %v624, %v622
          %v643 = vpack.c.b16 %v627, %v625
          %v644 = vpack.c.b16 %v628, %v626
          %661 = vmatpush.bf16.msra.mxu0 %v643
          %662 = vmatpush.bf16.msra.mxu0 %v641
          %663 = vmatpush.bf16.msra.mxu0 %v639
          %664 = vmatpush.bf16.msra.mxu0 %v637
          %665 = vmatpush.bf16.msra.mxu0 %v635
          %666 = vmatpush.bf16.msra.mxu0 %v633
          %667 = vmatpush.bf16.msra.mxu0 %v631
          %668 = vmatpush.bf16.msra.mxu0 %v629
          %669 = vmatmul.bf16.gmra.mxu0 %v565
          %v670 = vpop.f32.mrf.mxu0
          %v671 = vadd.f32 0.0, %v670
          %v672 = vpop.f32.mrf.mxu0
          %v673 = vadd.f32 0.0, %v672
          %674 = vmatmul.bf16.gmra.mxu0 %v566
          %v675 = vpop.f32.mrf.mxu0
          %v676 = vadd.f32 0.0, %v675
          %v677 = vpop.f32.mrf.mxu0
          %v678 = vadd.f32 0.0, %v677
          %679 = vmatmul.bf16.gmra.mxu0 %v567
          %v680 = vpop.f32.mrf.mxu0
          %v681 = vadd.f32 0.0, %v680
          %v682 = vpop.f32.mrf.mxu0
          %v683 = vadd.f32 0.0, %v682
          %684 = vmatmul.bf16.gmra.mxu0 %v568
          %v685 = vpop.f32.mrf.mxu0
          %v686 = vadd.f32 0.0, %v685
          %v687 = vpop.f32.mrf.mxu0
          %v688 = vadd.f32 0.0, %v687
          %689 = vmatmul.bf16.gmra.mxu0 %v569
          %v690 = vpop.f32.mrf.mxu0
          %v691 = vadd.f32 0.0, %v690
          %v692 = vpop.f32.mrf.mxu0
          %v693 = vadd.f32 0.0, %v692
          %694 = vmatmul.bf16.gmra.mxu0 %v570
          %v695 = vpop.f32.mrf.mxu0
          %v696 = vadd.f32 0.0, %v695
          %v697 = vpop.f32.mrf.mxu0
          %v698 = vadd.f32 0.0, %v697
          %699 = vmatmul.bf16.gmra.mxu0 %v571
          %v700 = vpop.f32.mrf.mxu0
          %v701 = vadd.f32 0.0, %v700
          %v702 = vpop.f32.mrf.mxu0
          %v703 = vadd.f32 0.0, %v702
          %704 = vmatmul.bf16.gmra.mxu0 %v572
          %v705 = vpop.f32.mrf.mxu0
          %v706 = vadd.f32 0.0, %v705
          %v707 = vpop.f32.mrf.mxu0
          %v708 = vadd.f32 0.0, %v707
          %709 = vdwg.mxu0
          %710 = vmatpush.bf16.msra.mxu0 %v644
          %711 = vmatpush.bf16.msra.mxu0 %v642
          %712 = vmatpush.bf16.msra.mxu0 %v640
          %713 = vmatpush.bf16.msra.mxu0 %v638
          %714 = vmatpush.bf16.msra.mxu0 %v636
          %715 = vmatpush.bf16.msra.mxu0 %v634
          %716 = vmatpush.bf16.msra.mxu0 %v632
          %717 = vmatpush.bf16.msra.mxu0 %v630
          %718 = vmatmul.bf16.gmra.mxu0 %v565
          %v719 = vpop.f32.mrf.mxu0
          %v720 = vadd.f32 0.0, %v719
          %v721 = vpop.f32.mrf.mxu0
          %v722 = vadd.f32 0.0, %v721
          %723 = vmatmul.bf16.gmra.mxu0 %v566
          %v724 = vpop.f32.mrf.mxu0
          %v725 = vadd.f32 0.0, %v724
          %v726 = vpop.f32.mrf.mxu0
          %v727 = vadd.f32 0.0, %v726
          %728 = vmatmul.bf16.gmra.mxu0 %v567
          %v729 = vpop.f32.mrf.mxu0
          %v730 = vadd.f32 0.0, %v729
          %v731 = vpop.f32.mrf.mxu0
          %v732 = vadd.f32 0.0, %v731
          %733 = vmatmul.bf16.gmra.mxu0 %v568
          %v734 = vpop.f32.mrf.mxu0
          %v735 = vadd.f32 0.0, %v734
          %v736 = vpop.f32.mrf.mxu0
          %v737 = vadd.f32 0.0, %v736
          %738 = vmatmul.bf16.gmra.mxu0 %v569
          %v739 = vpop.f32.mrf.mxu0
          %v740 = vadd.f32 0.0, %v739
          %v741 = vpop.f32.mrf.mxu0
          %v742 = vadd.f32 0.0, %v741
          %743 = vmatmul.bf16.gmra.mxu0 %v570
          %v744 = vpop.f32.mrf.mxu0
          %v745 = vadd.f32 0.0, %v744
          %v746 = vpop.f32.mrf.mxu0
          %v747 = vadd.f32 0.0, %v746
          %748 = vmatmul.bf16.gmra.mxu0 %v571
          %v749 = vpop.f32.mrf.mxu0
          %v750 = vadd.f32 0.0, %v749
          %v751 = vpop.f32.mrf.mxu0
          %v752 = vadd.f32 0.0, %v751
          %753 = vmatmul.bf16.gmra.mxu0 %v572
          %v754 = vpop.f32.mrf.mxu0
          %v755 = vadd.f32 0.0, %v754
          %v756 = vpop.f32.mrf.mxu0
          %v757 = vadd.f32 0.0, %v756
          %758 = vdwg.mxu0
          %759 = vxpose.xlu0.b32.start [1/16] %v671, 128
          %760 = vxpose.xlu0.b32.cont [2/16] %v673, 128
          %761 = vxpose.xlu0.b32.cont [3/16] %v676, 128
          %762 = vxpose.xlu0.b32.cont [4/16] %v678, 128
          %763 = vxpose.xlu0.b32.cont [5/16] %v681, 128
          %764 = vxpose.xlu0.b32.cont [6/16] %v683, 128
          %765 = vxpose.xlu0.b32.cont [7/16] %v686, 128
          %766 = vxpose.xlu0.b32.cont [8/16] %v688, 128
          %767 = vxpose.xlu0.b32.cont [9/16] %v691, 128
          %768 = vxpose.xlu0.b32.cont [10/16] %v693, 128
          %769 = vxpose.xlu0.b32.cont [11/16] %v696, 128
          %770 = vxpose.xlu0.b32.cont [12/16] %v698, 128
          %771 = vxpose.xlu0.b32.cont [13/16] %v701, 128
          %772 = vxpose.xlu0.b32.cont [14/16] %v703, 128
          %773 = vxpose.xlu0.b32.cont [15/16] %v706, 128
          %774 = vxpose.xlu0.b32.end [16/16] %v708, 128
          %v775 = vpop.trf.xlu0
          %v776 = vpop.trf.xlu0
          %v777 = vpop.trf.xlu0
          %v778 = vpop.trf.xlu0
          %v779 = vpop.trf.xlu0
          %v780 = vpop.trf.xlu0
          %v781 = vpop.trf.xlu0
          %v782 = vpop.trf.xlu0
          %v783 = vpop.trf.xlu0
          %v784 = vpop.trf.xlu0
          %v785 = vpop.trf.xlu0
          %v786 = vpop.trf.xlu0
          %v787 = vpop.trf.xlu0
          %v788 = vpop.trf.xlu0
          %v789 = vpop.trf.xlu0
          %v790 = vpop.trf.xlu0
          %v791 = vpack.c.bf16 %v775, %v775
          %v792 = vpack.c.bf16 %v776, %v776
          %v793 = vpack.c.bf16 %v777, %v777
          %v794 = vpack.c.bf16 %v778, %v778
          %v795 = vpack.c.bf16 %v779, %v779
          %v796 = vpack.c.bf16 %v780, %v780
          %v797 = vpack.c.bf16 %v781, %v781
          %v798 = vpack.c.bf16 %v782, %v782
          %v799 = vpack.c.bf16 %v783, %v783
          %v800 = vpack.c.bf16 %v784, %v784
          %v801 = vpack.c.bf16 %v785, %v785
          %v802 = vpack.c.bf16 %v786, %v786
          %v803 = vpack.c.bf16 %v787, %v787
          %v804 = vpack.c.bf16 %v788, %v788
          %v805 = vpack.c.bf16 %v789, %v789
          %v806 = vpack.c.bf16 %v790, %v790
          %807 = vst [vmem:[#allocation2] sm:$0xf] %v791
          %808 = vst [vmem:[#allocation2 + $0x4] sm:$0xf] %v792
          %809 = vst [vmem:[#allocation2 + $0x8] sm:$0xf] %v793
          %810 = vst [vmem:[#allocation2 + $0xc] sm:$0xf] %v794
          %811 = vst [vmem:[#allocation2 + $0x10] sm:$0xf] %v795
          %812 = vst [vmem:[#allocation2 + $0x14] sm:$0xf] %v796
          %813 = vst [vmem:[#allocation2 + $0x18] sm:$0xf] %v797
          %814 = vst [vmem:[#allocation2 + $0x1c] sm:$0xf] %v798
          %815 = vst [vmem:[#allocation2 + $0x20] sm:$0xf] %v799
          %816 = vst [vmem:[#allocation2 + $0x24] sm:$0xf] %v800
          %817 = vst [vmem:[#allocation2 + $0x28] sm:$0xf] %v801
          %818 = vst [vmem:[#allocation2 + $0x2c] sm:$0xf] %v802
          %819 = vst [vmem:[#allocation2 + $0x30] sm:$0xf] %v803
          %820 = vst [vmem:[#allocation2 + $0x34] sm:$0xf] %v804
          %821 = vst [vmem:[#allocation2 + $0x38] sm:$0xf] %v805
          %822 = vst [vmem:[#allocation2 + $0x3c] sm:$0xf] %v806
          %v823 = vpack.c.bf16 %v720, %v720
          %v824 = vpack.c.bf16 %v722, %v722
          %v825 = vpack.c.bf16 %v725, %v725
          %v826 = vpack.c.bf16 %v727, %v727
          %v827 = vpack.c.bf16 %v730, %v730
          %v828 = vpack.c.bf16 %v732, %v732
          %v829 = vpack.c.bf16 %v735, %v735
          %v830 = vpack.c.bf16 %v737, %v737
          %v831 = vpack.c.bf16 %v740, %v740
          %v832 = vpack.c.bf16 %v742, %v742
          %v833 = vpack.c.bf16 %v745, %v745
          %v834 = vpack.c.bf16 %v747, %v747
          %v835 = vpack.c.bf16 %v750, %v750
          %v836 = vpack.c.bf16 %v752, %v752
          %v837 = vpack.c.bf16 %v755, %v755
          %v838 = vpack.c.bf16 %v757, %v757
          %839 = vst [vmem:[#allocation3] sm:$0xf] %v823
          %840 = vst [vmem:[#allocation3 + $0x4] sm:$0xf] %v824
          %841 = vst [vmem:[#allocation3 + $0x8] sm:$0xf] %v825
          %842 = vst [vmem:[#allocation3 + $0xc] sm:$0xf] %v826
          %843 = vst [vmem:[#allocation3 + $0x10] sm:$0xf] %v827
          %844 = vst [vmem:[#allocation3 + $0x14] sm:$0xf] %v828
          %845 = vst [vmem:[#allocation3 + $0x18] sm:$0xf] %v829
          %846 = vst [vmem:[#allocation3 + $0x1c] sm:$0xf] %v830
          %847 = vst [vmem:[#allocation3 + $0x20] sm:$0xf] %v831
          %848 = vst [vmem:[#allocation3 + $0x24] sm:$0xf] %v832
          %849 = vst [vmem:[#allocation3 + $0x28] sm:$0xf] %v833
          %850 = vst [vmem:[#allocation3 + $0x2c] sm:$0xf] %v834
          %851 = vst [vmem:[#allocation3 + $0x30] sm:$0xf] %v835
          %852 = vst [vmem:[#allocation3 + $0x34] sm:$0xf] %v836
          %853 = vst [vmem:[#allocation3 + $0x38] sm:$0xf] %v837
          %854 = vst [vmem:[#allocation3 + $0x3c] sm:$0xf] %v838
        $region88: #{tpu_custom_call.1} parent=55 // pred_fallthru
          _
        %v855 = vld [vmem:[%s429] sm:$0xff]
        %v856 = vld [vmem:[%s429 + $0x8] sm:$0xff]
        %v857 = vld [vmem:[%s429 + $0x10] sm:$0xff]
        %v858 = vld [vmem:[%s429 + $0x18] sm:$0xff]
        %v859 = vld [vmem:[%s429 + $0x20] sm:$0xff]
        %v860 = vld [vmem:[%s429 + $0x28] sm:$0xff]
        %v861 = vld [vmem:[%s429 + $0x30] sm:$0xff]
        %v862 = vld [vmem:[%s429 + $0x38] sm:$0xff]
        %v863 = vpack.c.bf16 %v856, %v855
        %v864 = vpack.c.bf16 %v858, %v857
        %v865 = vpack.c.bf16 %v860, %v859
        %v866 = vpack.c.bf16 %v862, %v861
        %v867 = vld [vmem:[#allocation10] sm:$0xf]
        %v868 = vld [vmem:[#allocation10 + $0x4] sm:$0xf]
        %v869 = vld [vmem:[#allocation10 + $0x8] sm:$0xf]
        %v870 = vld [vmem:[#allocation10 + $0xc] sm:$0xf]
        %v871 = vld [vmem:[#allocation10 + $0x10] sm:$0xf]
        %v872 = vld [vmem:[#allocation10 + $0x14] sm:$0xf]
        %v873 = vld [vmem:[#allocation10 + $0x18] sm:$0xf]
        %v874 = vld [vmem:[#allocation10 + $0x1c] sm:$0xf]
        %v875 = vld [vmem:[#allocation10 + $0x20] sm:$0xf]
        %v876 = vld [vmem:[#allocation10 + $0x24] sm:$0xf]
        %v877 = vld [vmem:[#allocation10 + $0x28] sm:$0xf]
        %v878 = vld [vmem:[#allocation10 + $0x2c] sm:$0xf]
        %v879 = vld [vmem:[#allocation10 + $0x30] sm:$0xf]
        %v880 = vld [vmem:[#allocation10 + $0x34] sm:$0xf]
        %v881 = vld [vmem:[#allocation10 + $0x38] sm:$0xf]
        %v882 = vld [vmem:[#allocation10 + $0x3c] sm:$0xf]
        %v899 = vunpack.c.l.b16 %v867
        %v900 = vunpack.c.l.b16 %v868
        %v901 = vunpack.c.l.b16 %v869
        %v902 = vunpack.c.l.b16 %v870
        %v903 = vunpack.c.l.b16 %v871
        %v904 = vunpack.c.l.b16 %v872
        %v905 = vunpack.c.l.b16 %v873
        %v906 = vunpack.c.l.b16 %v874
        %v907 = vunpack.c.l.b16 %v875
        %v908 = vunpack.c.l.b16 %v876
        %v909 = vunpack.c.l.b16 %v877
        %v910 = vunpack.c.l.b16 %v878
        %v911 = vunpack.c.l.b16 %v879
        %v912 = vunpack.c.l.b16 %v880
        %v913 = vunpack.c.l.b16 %v881
        %v914 = vunpack.c.l.b16 %v882
        %v915 = vpack.c.b16 %v900, %v899
        %v916 = vpack.c.b16 %v902, %v901
        %v917 = vpack.c.b16 %v904, %v903
        %v918 = vpack.c.b16 %v906, %v905
        %v919 = vpack.c.b16 %v908, %v907
        %v920 = vpack.c.b16 %v910, %v909
        %v921 = vpack.c.b16 %v912, %v911
        %v922 = vpack.c.b16 %v914, %v913
        %931 = vmatpush.bf16.msra.mxu0 %v922
        %932 = vmatpush.bf16.msra.mxu0 %v921
        %933 = vmatpush.bf16.msra.mxu0 %v920
        %934 = vmatpush.bf16.msra.mxu0 %v919
        %935 = vmatpush.bf16.msra.mxu0 %v918
        %936 = vmatpush.bf16.msra.mxu0 %v917
        %937 = vmatpush.bf16.msra.mxu0 %v916
        %938 = vmatpush.bf16.msra.mxu0 %v915
        %939 = vmatmul.bf16.gmra.mxu0 %v863
        %v940 = vpop.f32.mrf.mxu0
        %v941 = vadd.f32 0.0, %v940
        %v942 = vpop.f32.mrf.mxu0
        %v943 = vadd.f32 0.0, %v942
        %944 = vmatmul.bf16.gmra.mxu0 %v864
        %v945 = vpop.f32.mrf.mxu0
        %v946 = vadd.f32 0.0, %v945
        %v947 = vpop.f32.mrf.mxu0
        %v948 = vadd.f32 0.0, %v947
        %949 = vmatmul.bf16.gmra.mxu0 %v865
        %v950 = vpop.f32.mrf.mxu0
        %v951 = vadd.f32 0.0, %v950
        %v952 = vpop.f32.mrf.mxu0
        %v953 = vadd.f32 0.0, %v952
        %954 = vmatmul.bf16.gmra.mxu0 %v866
        %v955 = vpop.f32.mrf.mxu0
        %v956 = vadd.f32 0.0, %v955
        %v957 = vpop.f32.mrf.mxu0
        %v958 = vadd.f32 0.0, %v957
        %959 = vdwg.mxu0
        %v960 = vmul.f32 %v941, 0.088388346
        %v961 = vmul.f32 %v943, 0.088388346
        %v962 = vmul.f32 %v946, 0.088388346
        %v963 = vmul.f32 %v948, 0.088388346
        %v964 = vmul.f32 %v951, 0.088388346
        %v965 = vmul.f32 %v953, 0.088388346
        %v966 = vmul.f32 %v956, 0.088388346
        %v967 = vmul.f32 %v958, 0.088388346
        %v968 = vpack.c.bf16 %v961, %v960
        %v969 = vpack.c.bf16 %v963, %v962
        %v970 = vpack.c.bf16 %v965, %v964
        %v971 = vpack.c.bf16 %v967, %v966
        %v972 = vld [vmem:[#allocation2] sm:$0xf]
        %v973 = vld [vmem:[#allocation2 + $0x4] sm:$0xf]
        %v974 = vld [vmem:[#allocation2 + $0x8] sm:$0xf]
        %v975 = vld [vmem:[#allocation2 + $0xc] sm:$0xf]
        %v976 = vld [vmem:[#allocation2 + $0x10] sm:$0xf]
        %v977 = vld [vmem:[#allocation2 + $0x14] sm:$0xf]
        %v978 = vld [vmem:[#allocation2 + $0x18] sm:$0xf]
        %v979 = vld [vmem:[#allocation2 + $0x1c] sm:$0xf]
        %v980 = vld [vmem:[#allocation2 + $0x20] sm:$0xf]
        %v981 = vld [vmem:[#allocation2 + $0x24] sm:$0xf]
        %v982 = vld [vmem:[#allocation2 + $0x28] sm:$0xf]
        %v983 = vld [vmem:[#allocation2 + $0x2c] sm:$0xf]
        %v984 = vld [vmem:[#allocation2 + $0x30] sm:$0xf]
        %v985 = vld [vmem:[#allocation2 + $0x34] sm:$0xf]
        %v986 = vld [vmem:[#allocation2 + $0x38] sm:$0xf]
        %v987 = vld [vmem:[#allocation2 + $0x3c] sm:$0xf]
        %v1004 = vunpack.c.l.b16 %v972
        %v1005 = vunpack.c.l.b16 %v973
        %v1006 = vunpack.c.l.b16 %v974
        %v1007 = vunpack.c.l.b16 %v975
        %v1008 = vunpack.c.l.b16 %v976
        %v1009 = vunpack.c.l.b16 %v977
        %v1010 = vunpack.c.l.b16 %v978
        %v1011 = vunpack.c.l.b16 %v979
        %v1012 = vunpack.c.l.b16 %v980
        %v1013 = vunpack.c.l.b16 %v981
        %v1014 = vunpack.c.l.b16 %v982
        %v1015 = vunpack.c.l.b16 %v983
        %v1016 = vunpack.c.l.b16 %v984
        %v1017 = vunpack.c.l.b16 %v985
        %v1018 = vunpack.c.l.b16 %v986
        %v1019 = vunpack.c.l.b16 %v987
        %v1020 = vpack.c.b16 %v1005, %v1004
        %v1021 = vpack.c.b16 %v1007, %v1006
        %v1022 = vpack.c.b16 %v1009, %v1008
        %v1023 = vpack.c.b16 %v1011, %v1010
        %v1024 = vpack.c.b16 %v1013, %v1012
        %v1025 = vpack.c.b16 %v1015, %v1014
        %v1026 = vpack.c.b16 %v1017, %v1016
        %v1027 = vpack.c.b16 %v1019, %v1018
        %1036 = vmatpush.bf16.msra.mxu0 %v1027
        %1037 = vmatpush.bf16.msra.mxu0 %v1026
        %1038 = vmatpush.bf16.msra.mxu0 %v1025
        %1039 = vmatpush.bf16.msra.mxu0 %v1024
        %1040 = vmatpush.bf16.msra.mxu0 %v1023
        %1041 = vmatpush.bf16.msra.mxu0 %v1022
        %1042 = vmatpush.bf16.msra.mxu0 %v1021
        %1043 = vmatpush.bf16.msra.mxu0 %v1020
        %1044 = vmatmul.bf16.gmra.mxu0 %v968
        %v1045 = vpop.f32.mrf.mxu0
        %v1046 = vadd.f32 0.0, %v1045
        %v1047 = vpop.f32.mrf.mxu0
        %v1048 = vadd.f32 0.0, %v1047
        %1049 = vmatmul.bf16.gmra.mxu0 %v969
        %v1050 = vpop.f32.mrf.mxu0
        %v1051 = vadd.f32 0.0, %v1050
        %v1052 = vpop.f32.mrf.mxu0
        %v1053 = vadd.f32 0.0, %v1052
        %1054 = vmatmul.bf16.gmra.mxu0 %v970
        %v1055 = vpop.f32.mrf.mxu0
        %v1056 = vadd.f32 0.0, %v1055
        %v1057 = vpop.f32.mrf.mxu0
        %v1058 = vadd.f32 0.0, %v1057
        %1059 = vmatmul.bf16.gmra.mxu0 %v971
        %v1060 = vpop.f32.mrf.mxu0
        %v1061 = vadd.f32 0.0, %v1060
        %v1062 = vpop.f32.mrf.mxu0
        %v1063 = vadd.f32 0.0, %v1062
        %1064 = vdwg.mxu0
        %1065 = vmax.xlane.f32.xlu0 %v1046
        %v1066 = vpop.xlane.xlu0 %1065
        %1067 = vmax.xlane.f32.xlu0 %v1048
        %v1068 = vpop.xlane.xlu0 %1067
        %1069 = vmax.xlane.f32.xlu0 %v1051
        %v1070 = vpop.xlane.xlu0 %1069
        %1071 = vmax.xlane.f32.xlu0 %v1053
        %v1072 = vpop.xlane.xlu0 %1071
        %1073 = vmax.xlane.f32.xlu0 %v1056
        %v1074 = vpop.xlane.xlu0 %1073
        %1075 = vmax.xlane.f32.xlu0 %v1058
        %v1076 = vpop.xlane.xlu0 %1075
        %1077 = vmax.xlane.f32.xlu0 %v1061
        %v1078 = vpop.xlane.xlu0 %1077
        %1079 = vmax.xlane.f32.xlu0 %v1063
        %v1080 = vpop.xlane.xlu0 %1079
        %v1081 = vsub.f32 %v1046, %v1066
        %v1082 = vsub.f32 %v1048, %v1068
        %v1083 = vsub.f32 %v1051, %v1070
        %v1084 = vsub.f32 %v1053, %v1072
        %v1085 = vsub.f32 %v1056, %v1074
        %v1086 = vsub.f32 %v1058, %v1076
        %v1087 = vsub.f32 %v1061, %v1078
        %v1088 = vsub.f32 %v1063, %v1080
        %v1089 = vmul.f32 %v1081, 1.442695
        %v1090 = vpow.pop %v1089
        %v1091 = vmul.f32 %v1082, 1.442695
        %v1092 = vpow.pop %v1091
        %v1093 = vmul.f32 %v1083, 1.442695
        %v1094 = vpow.pop %v1093
        %v1095 = vmul.f32 %v1084, 1.442695
        %v1096 = vpow.pop %v1095
        %v1097 = vmul.f32 %v1085, 1.442695
        %v1098 = vpow.pop %v1097
        %v1099 = vmul.f32 %v1086, 1.442695
        %v1100 = vpow.pop %v1099
        %v1101 = vmul.f32 %v1087, 1.442695
        %v1102 = vpow.pop %v1101
        %v1103 = vmul.f32 %v1088, 1.442695
        %v1104 = vpow.pop %v1103
        %1105 = vadd.xlane.f32.xlu0 %v1090
        %v1106 = vpop.xlane.xlu0 %1105
        %1107 = vadd.xlane.f32.xlu0 %v1092
        %v1108 = vpop.xlane.xlu0 %1107
        %1109 = vadd.xlane.f32.xlu0 %v1094
        %v1110 = vpop.xlane.xlu0 %1109
        %1111 = vadd.xlane.f32.xlu0 %v1096
        %v1112 = vpop.xlane.xlu0 %1111
        %1113 = vadd.xlane.f32.xlu0 %v1098
        %v1114 = vpop.xlane.xlu0 %1113
        %1115 = vadd.xlane.f32.xlu0 %v1100
        %v1116 = vpop.xlane.xlu0 %1115
        %1117 = vadd.xlane.f32.xlu0 %v1102
        %v1118 = vpop.xlane.xlu0 %1117
        %1119 = vadd.xlane.f32.xlu0 %v1104
        %v1120 = vpop.xlane.xlu0 %1119
        %v1121 = vrcp.pop %v1106
        %v1122 = vrcp.pop %v1108
        %v1123 = vrcp.pop %v1110
        %v1124 = vrcp.pop %v1112
        %v1125 = vrcp.pop %v1114
        %v1126 = vrcp.pop %v1116
        %v1127 = vrcp.pop %v1118
        %v1128 = vrcp.pop %v1120
        %v1129 = vmul.f32 %v1090, %v1121
        %v1130 = vmul.f32 %v1092, %v1122
        %v1131 = vmul.f32 %v1094, %v1123
        %v1132 = vmul.f32 %v1096, %v1124
        %v1133 = vmul.f32 %v1098, %v1125
        %v1134 = vmul.f32 %v1100, %v1126
        %v1135 = vmul.f32 %v1102, %v1127
        %v1136 = vmul.f32 %v1104, %v1128
        %v1137 = vpack.c.bf16 %v1130, %v1129
        %v1138 = vpack.c.bf16 %v1132, %v1131
        %v1139 = vpack.c.bf16 %v1134, %v1133
        %v1140 = vpack.c.bf16 %v1136, %v1135
        %v1141 = vld [vmem:[#allocation3] sm:$0xf]
        %v1142 = vld [vmem:[#allocation3 + $0x4] sm:$0xf]
        %v1143 = vld [vmem:[#allocation3 + $0x8] sm:$0xf]
        %v1144 = vld [vmem:[#allocation3 + $0xc] sm:$0xf]
        %v1145 = vld [vmem:[#allocation3 + $0x10] sm:$0xf]
        %v1146 = vld [vmem:[#allocation3 + $0x14] sm:$0xf]
        %v1147 = vld [vmem:[#allocation3 + $0x18] sm:$0xf]
        %v1148 = vld [vmem:[#allocation3 + $0x1c] sm:$0xf]
        %v1149 = vld [vmem:[#allocation3 + $0x20] sm:$0xf]
        %v1150 = vld [vmem:[#allocation3 + $0x24] sm:$0xf]
        %v1151 = vld [vmem:[#allocation3 + $0x28] sm:$0xf]
        %v1152 = vld [vmem:[#allocation3 + $0x2c] sm:$0xf]
        %v1153 = vld [vmem:[#allocation3 + $0x30] sm:$0xf]
        %v1154 = vld [vmem:[#allocation3 + $0x34] sm:$0xf]
        %v1155 = vld [vmem:[#allocation3 + $0x38] sm:$0xf]
        %v1156 = vld [vmem:[#allocation3 + $0x3c] sm:$0xf]
        %v1173 = vunpack.c.l.b16 %v1141
        %v1174 = vunpack.c.l.b16 %v1142
        %v1175 = vunpack.c.l.b16 %v1143
        %v1176 = vunpack.c.l.b16 %v1144
        %v1177 = vunpack.c.l.b16 %v1145
        %v1178 = vunpack.c.l.b16 %v1146
        %v1179 = vunpack.c.l.b16 %v1147
        %v1180 = vunpack.c.l.b16 %v1148
        %v1181 = vunpack.c.l.b16 %v1149
        %v1182 = vunpack.c.l.b16 %v1150
        %v1183 = vunpack.c.l.b16 %v1151
        %v1184 = vunpack.c.l.b16 %v1152
        %v1185 = vunpack.c.l.b16 %v1153
        %v1186 = vunpack.c.l.b16 %v1154
        %v1187 = vunpack.c.l.b16 %v1155
        %v1188 = vunpack.c.l.b16 %v1156
        %v1189 = vpack.c.b16 %v1174, %v1173
        %v1190 = vpack.c.b16 %v1176, %v1175
        %v1191 = vpack.c.b16 %v1178, %v1177
        %v1192 = vpack.c.b16 %v1180, %v1179
        %v1193 = vpack.c.b16 %v1182, %v1181
        %v1194 = vpack.c.b16 %v1184, %v1183
        %v1195 = vpack.c.b16 %v1186, %v1185
        %v1196 = vpack.c.b16 %v1188, %v1187
        %1205 = vmatpush.bf16.msra.mxu0 %v1196
        %1206 = vmatpush.bf16.msra.mxu0 %v1195
        %1207 = vmatpush.bf16.msra.mxu0 %v1194
        %1208 = vmatpush.bf16.msra.mxu0 %v1193
        %1209 = vmatpush.bf16.msra.mxu0 %v1192
        %1210 = vmatpush.bf16.msra.mxu0 %v1191
        %1211 = vmatpush.bf16.msra.mxu0 %v1190
        %1212 = vmatpush.bf16.msra.mxu0 %v1189
        %1213 = vmatmul.bf16.gmra.mxu0 %v1137
        %v1214 = vpop.f32.mrf.mxu0
        %v1215 = vadd.f32 0.0, %v1214
        %v1216 = vpop.f32.mrf.mxu0
        %v1217 = vadd.f32 0.0, %v1216
        %1218 = vmatmul.bf16.gmra.mxu0 %v1138
        %v1219 = vpop.f32.mrf.mxu0
        %v1220 = vadd.f32 0.0, %v1219
        %v1221 = vpop.f32.mrf.mxu0
        %v1222 = vadd.f32 0.0, %v1221
        %1223 = vmatmul.bf16.gmra.mxu0 %v1139
        %v1224 = vpop.f32.mrf.mxu0
        %v1225 = vadd.f32 0.0, %v1224
        %v1226 = vpop.f32.mrf.mxu0
        %v1227 = vadd.f32 0.0, %v1226
        %1228 = vmatmul.bf16.gmra.mxu0 %v1140
        %v1229 = vpop.f32.mrf.mxu0
        %v1230 = vadd.f32 0.0, %v1229
        %v1231 = vpop.f32.mrf.mxu0
        %v1232 = vadd.f32 0.0, %v1231
        %1233 = vdwg.mxu0
        %v1234 = vpack.c.bf16 %v1217, %v1215
        %v1235 = vpack.c.bf16 %v1222, %v1220
        %v1236 = vpack.c.bf16 %v1227, %v1225
        %v1237 = vpack.c.bf16 %v1232, %v1230
        %v1238 = vld [vmem:[#allocation12] sm:$0xf]
        %v1239 = vld [vmem:[#allocation12 + $0x4] sm:$0xf]
        %v1240 = vld [vmem:[#allocation12 + $0x8] sm:$0xf]
        %v1241 = vld [vmem:[#allocation12 + $0xc] sm:$0xf]
        %v1242 = vld [vmem:[#allocation12 + $0x10] sm:$0xf]
        %v1243 = vld [vmem:[#allocation12 + $0x14] sm:$0xf]
        %v1244 = vld [vmem:[#allocation12 + $0x18] sm:$0xf]
        %v1245 = vld [vmem:[#allocation12 + $0x1c] sm:$0xf]
        %v1246 = vld [vmem:[#allocation12 + $0x20] sm:$0xf]
        %v1247 = vld [vmem:[#allocation12 + $0x24] sm:$0xf]
        %v1248 = vld [vmem:[#allocation12 + $0x28] sm:$0xf]
        %v1249 = vld [vmem:[#allocation12 + $0x2c] sm:$0xf]
        %v1250 = vld [vmem:[#allocation12 + $0x30] sm:$0xf]
        %v1251 = vld [vmem:[#allocation12 + $0x34] sm:$0xf]
        %v1252 = vld [vmem:[#allocation12 + $0x38] sm:$0xf]
        %v1253 = vld [vmem:[#allocation12 + $0x3c] sm:$0xf]
        %v1270 = vunpack.c.l.b16 %v1238
        %v1271 = vunpack.c.l.b16 %v1239
        %v1272 = vunpack.c.l.b16 %v1240
        %v1273 = vunpack.c.l.b16 %v1241
        %v1274 = vunpack.c.l.b16 %v1242
        %v1275 = vunpack.c.l.b16 %v1243
        %v1276 = vunpack.c.l.b16 %v1244
        %v1277 = vunpack.c.l.b16 %v1245
        %v1278 = vunpack.c.l.b16 %v1246
        %v1279 = vunpack.c.l.b16 %v1247
        %v1280 = vunpack.c.l.b16 %v1248
        %v1281 = vunpack.c.l.b16 %v1249
        %v1282 = vunpack.c.l.b16 %v1250
        %v1283 = vunpack.c.l.b16 %v1251
        %v1284 = vunpack.c.l.b16 %v1252
        %v1285 = vunpack.c.l.b16 %v1253
        %v1286 = vpack.c.b16 %v1271, %v1270
        %v1287 = vpack.c.b16 %v1273, %v1272
        %v1288 = vpack.c.b16 %v1275, %v1274
        %v1289 = vpack.c.b16 %v1277, %v1276
        %v1290 = vpack.c.b16 %v1279, %v1278
        %v1291 = vpack.c.b16 %v1281, %v1280
        %v1292 = vpack.c.b16 %v1283, %v1282
        %v1293 = vpack.c.b16 %v1285, %v1284
        %1302 = vmatpush.bf16.msra.mxu0 %v1293
        %1303 = vmatpush.bf16.msra.mxu0 %v1292
        %1304 = vmatpush.bf16.msra.mxu0 %v1291
        %1305 = vmatpush.bf16.msra.mxu0 %v1290
        %1306 = vmatpush.bf16.msra.mxu0 %v1289
        %1307 = vmatpush.bf16.msra.mxu0 %v1288
        %1308 = vmatpush.bf16.msra.mxu0 %v1287
        %1309 = vmatpush.bf16.msra.mxu0 %v1286
        %1310 = vmatmul.bf16.gmra.mxu0 %v1234
        %v1311 = vpop.f32.mrf.mxu0
        %v1312 = vadd.f32 0.0, %v1311
        %v1313 = vpop.f32.mrf.mxu0
        %v1314 = vadd.f32 0.0, %v1313
        %1315 = vmatmul.bf16.gmra.mxu0 %v1235
        %v1316 = vpop.f32.mrf.mxu0
        %v1317 = vadd.f32 0.0, %v1316
        %v1318 = vpop.f32.mrf.mxu0
        %v1319 = vadd.f32 0.0, %v1318
        %1320 = vmatmul.bf16.gmra.mxu0 %v1236
        %v1321 = vpop.f32.mrf.mxu0
        %v1322 = vadd.f32 0.0, %v1321
        %v1323 = vpop.f32.mrf.mxu0
        %v1324 = vadd.f32 0.0, %v1323
        %1325 = vmatmul.bf16.gmra.mxu0 %v1237
        %v1326 = vpop.f32.mrf.mxu0
        %v1327 = vadd.f32 0.0, %v1326
        %v1328 = vpop.f32.mrf.mxu0
        %v1329 = vadd.f32 0.0, %v1328
        %1330 = vdwg.mxu0
        %v1331 = vld [vmem:[%s8] sm:$0x1]
        %v1332 = vld [vmem:[%s8 + $0x1] sm:$0x1]
        %v1333 = vld [vmem:[%s8 + $0x2] sm:$0x1]
        %v1334 = vmul.f32 %v1312, %v1312
        %v1335 = vmul.f32 %v1314, %v1314
        %v1336 = vmul.f32 %v1317, %v1317
        %v1337 = vmul.f32 %v1319, %v1319
        %v1338 = vmul.f32 %v1322, %v1322
        %v1339 = vmul.f32 %v1324, %v1324
        %v1340 = vmul.f32 %v1327, %v1327
        %v1341 = vmul.f32 %v1329, %v1329
        %1342 = vadd.xlane.f32.xlu0 %v1334
        %v1343 = vpop.xlane.xlu0 %1342
        %1344 = vadd.xlane.f32.xlu0 %v1335
        %v1345 = vpop.xlane.xlu0 %1344
        %1346 = vadd.xlane.f32.xlu0 %v1336
        %v1347 = vpop.xlane.xlu0 %1346
        %1348 = vadd.xlane.f32.xlu0 %v1337
        %v1349 = vpop.xlane.xlu0 %1348
        %1350 = vadd.xlane.f32.xlu0 %v1338
        %v1351 = vpop.xlane.xlu0 %1350
        %1352 = vadd.xlane.f32.xlu0 %v1339
        %v1353 = vpop.xlane.xlu0 %1352
        %1354 = vadd.xlane.f32.xlu0 %v1340
        %v1355 = vpop.xlane.xlu0 %1354
        %1356 = vadd.xlane.f32.xlu0 %v1341
        %v1357 = vpop.xlane.xlu0 %1356
        %v1358 = vrcp.pop 128.0
        %v1359 = vmul.f32 128.0, %v1358
        %v1360 = vsub.f32 1.0, %v1359
        %v1361 = vmul.f32 %v1358, %v1360
        %v1362 = vadd.f32 %v1358, %v1361
        %vm1363 = vweird.f32 %v1358
        %v1364 = vsel %vm1363, %v1358, %v1362
        %v1365 = vmul.f32 %v1343, %v1364
        %v1366 = vmul.f32 %v1345, %v1364
        %v1367 = vmul.f32 %v1347, %v1364
        %v1368 = vmul.f32 %v1349, %v1364
        %v1369 = vmul.f32 %v1351, %v1364
        %v1370 = vmul.f32 %v1353, %v1364
        %v1371 = vmul.f32 %v1355, %v1364
        %v1372 = vmul.f32 %v1357, %v1364
        %v1373 = vadd.f32 %v1365, 1e-06
        %v1374 = vadd.f32 %v1366, 1e-06
        %v1375 = vadd.f32 %v1367, 1e-06
        %v1376 = vadd.f32 %v1368, 1e-06
        %v1377 = vadd.f32 %v1369, 1e-06
        %v1378 = vadd.f32 %v1370, 1e-06
        %v1379 = vadd.f32 %v1371, 1e-06
        %v1380 = vadd.f32 %v1372, 1e-06
        %v1381 = vrsqrt.pop %v1373
        %v1382 = vmul.f32 %v1381, %v1373
        %v1383 = vmul.f32 %v1382, %v1381
        %v1384 = vmul.f32 0.5, %v1383
        %v1385 = vsub.f32 1.5, %v1384
        %v1386 = vmul.f32 %v1381, %v1385
        %vm1387 = vweird.f32 %v1373
        %vm1388 = vweird.f32 %v1381
        %vm1389 = vmor %vm1387, %vm1388
        %v1390 = vsel %vm1389, %v1381, %v1386
        %v1391 = vrsqrt.pop %v1374
        %v1392 = vmul.f32 %v1391, %v1374
        %v1393 = vmul.f32 %v1392, %v1391
        %v1394 = vmul.f32 0.5, %v1393
        %v1395 = vsub.f32 1.5, %v1394
        %v1396 = vmul.f32 %v1391, %v1395
        %vm1397 = vweird.f32 %v1374
        %vm1398 = vweird.f32 %v1391
        %vm1399 = vmor %vm1397, %vm1398
        %v1400 = vsel %vm1399, %v1391, %v1396
        %v1401 = vrsqrt.pop %v1375
        %v1402 = vmul.f32 %v1401, %v1375
        %v1403 = vmul.f32 %v1402, %v1401
        %v1404 = vmul.f32 0.5, %v1403
        %v1405 = vsub.f32 1.5, %v1404
        %v1406 = vmul.f32 %v1401, %v1405
        %vm1407 = vweird.f32 %v1375
        %vm1408 = vweird.f32 %v1401
        %vm1409 = vmor %vm1407, %vm1408
        %v1410 = vsel %vm1409, %v1401, %v1406
        %v1411 = vrsqrt.pop %v1376
        %v1412 = vmul.f32 %v1411, %v1376
        %v1413 = vmul.f32 %v1412, %v1411
        %v1414 = vmul.f32 0.5, %v1413
        %v1415 = vsub.f32 1.5, %v1414
        %v1416 = vmul.f32 %v1411, %v1415
        %vm1417 = vweird.f32 %v1376
        %vm1418 = vweird.f32 %v1411
        %vm1419 = vmor %vm1417, %vm1418
        %v1420 = vsel %vm1419, %v1411, %v1416
        %v1421 = vrsqrt.pop %v1377
        %v1422 = vmul.f32 %v1421, %v1377
        %v1423 = vmul.f32 %v1422, %v1421
        %v1424 = vmul.f32 0.5, %v1423
        %v1425 = vsub.f32 1.5, %v1424
        %v1426 = vmul.f32 %v1421, %v1425
        %vm1427 = vweird.f32 %v1377
        %vm1428 = vweird.f32 %v1421
        %vm1429 = vmor %vm1427, %vm1428
        %v1430 = vsel %vm1429, %v1421, %v1426
        %v1431 = vrsqrt.pop %v1378
        %v1432 = vmul.f32 %v1431, %v1378
        %v1433 = vmul.f32 %v1432, %v1431
        %v1434 = vmul.f32 0.5, %v1433
        %v1435 = vsub.f32 1.5, %v1434
        %v1436 = vmul.f32 %v1431, %v1435
        %vm1437 = vweird.f32 %v1378
        %vm1438 = vweird.f32 %v1431
        %vm1439 = vmor %vm1437, %vm1438
        %v1440 = vsel %vm1439, %v1431, %v1436
        %v1441 = vrsqrt.pop %v1379
        %v1442 = vmul.f32 %v1441, %v1379
        %v1443 = vmul.f32 %v1442, %v1441
        %v1444 = vmul.f32 0.5, %v1443
        %v1445 = vsub.f32 1.5, %v1444
        %v1446 = vmul.f32 %v1441, %v1445
        %vm1447 = vweird.f32 %v1379
        %vm1448 = vweird.f32 %v1441
        %vm1449 = vmor %vm1447, %vm1448
        %v1450 = vsel %vm1449, %v1441, %v1446
        %v1451 = vrsqrt.pop %v1380
        %v1452 = vmul.f32 %v1451, %v1380
        %v1453 = vmul.f32 %v1452, %v1451
        %v1454 = vmul.f32 0.5, %v1453
        %v1455 = vsub.f32 1.5, %v1454
        %v1456 = vmul.f32 %v1451, %v1455
        %vm1457 = vweird.f32 %v1380
        %vm1458 = vweird.f32 %v1451
        %vm1459 = vmor %vm1457, %vm1458
        %v1460 = vsel %vm1459, %v1451, %v1456
        %v1461 = vmul.f32 %v1312, %v1390
        %v1462 = vmul.f32 %v1314, %v1400
        %v1463 = vmul.f32 %v1317, %v1410
        %v1464 = vmul.f32 %v1319, %v1420
        %v1465 = vmul.f32 %v1322, %v1430
        %v1466 = vmul.f32 %v1324, %v1440
        %v1467 = vmul.f32 %v1327, %v1450
        %v1468 = vmul.f32 %v1329, %v1460
        %v1469 = vperm.slane %v1331, 0
        %v1470 = vmul.f32 %v1461, %v1469
        %v1471 = vmul.f32 %v1462, %v1469
        %v1472 = vmul.f32 %v1463, %v1469
        %v1473 = vmul.f32 %v1464, %v1469
        %v1474 = vmul.f32 %v1465, %v1469
        %v1475 = vmul.f32 %v1466, %v1469
        %v1476 = vmul.f32 %v1467, %v1469
        %v1477 = vmul.f32 %v1468, %v1469
        %v1478 = vadd.f32 %v1470, %v855
        %v1479 = vadd.f32 %v1471, %v856
        %v1480 = vadd.f32 %v1472, %v857
        %v1481 = vadd.f32 %v1473, %v858
        %v1482 = vadd.f32 %v1474, %v859
        %v1483 = vadd.f32 %v1475, %v860
        %v1484 = vadd.f32 %v1476, %v861
        %v1485 = vadd.f32 %v1477, %v862
        %v1486 = vpack.c.bf16 %v1479, %v1478
        %v1487 = vpack.c.bf16 %v1481, %v1480
        %v1488 = vpack.c.bf16 %v1483, %v1482
        %v1489 = vpack.c.bf16 %v1485, %v1484
        %v1490 = vld [vmem:[#allocation13] sm:$0xff]
        %v1491 = vld [vmem:[#allocation13 + $0x8] sm:$0xff]
        %v1492 = vld [vmem:[#allocation13 + $0x10] sm:$0xff]
        %v1493 = vld [vmem:[#allocation13 + $0x18] sm:$0xff]
        %v1494 = vld [vmem:[#allocation13 + $0x20] sm:$0xff]
        %v1495 = vld [vmem:[#allocation13 + $0x28] sm:$0xff]
        %v1496 = vld [vmem:[#allocation13 + $0x30] sm:$0xff]
        %v1497 = vld [vmem:[#allocation13 + $0x38] sm:$0xff]
        %v1498 = vld [vmem:[#allocation13 + $0x40] sm:$0xff]
        %v1499 = vld [vmem:[#allocation13 + $0x48] sm:$0xff]
        %v1500 = vld [vmem:[#allocation13 + $0x50] sm:$0xff]
        %v1501 = vld [vmem:[#allocation13 + $0x58] sm:$0xff]
        %v1502 = vld [vmem:[#allocation13 + $0x60] sm:$0xff]
        %v1503 = vld [vmem:[#allocation13 + $0x68] sm:$0xff]
        %v1504 = vld [vmem:[#allocation13 + $0x70] sm:$0xff]
        %v1505 = vld [vmem:[#allocation13 + $0x78] sm:$0xff]
        %v1506 = vld [vmem:[%s6] sm:$0x3]
        %v1508 = vperm.slane %v1506, 0
        %v1509 = vperm.slane %v1506, 1
        %v1528 = vunpack.c.l.b16 %v1490
        %v1529 = vunpack.c.h.b16 %v1490
        %v1530 = vunpack.c.l.b16 %v1491
        %v1531 = vunpack.c.h.b16 %v1491
        %v1532 = vunpack.c.l.b16 %v1492
        %v1533 = vunpack.c.h.b16 %v1492
        %v1534 = vunpack.c.l.b16 %v1493
        %v1535 = vunpack.c.h.b16 %v1493
        %v1536 = vunpack.c.l.b16 %v1494
        %v1537 = vunpack.c.h.b16 %v1494
        %v1538 = vunpack.c.l.b16 %v1495
        %v1539 = vunpack.c.h.b16 %v1495
        %v1540 = vunpack.c.l.b16 %v1496
        %v1541 = vunpack.c.h.b16 %v1496
        %v1542 = vunpack.c.l.b16 %v1497
        %v1543 = vunpack.c.h.b16 %v1497
        %v1544 = vunpack.c.l.b16 %v1498
        %v1545 = vunpack.c.h.b16 %v1498
        %v1546 = vunpack.c.l.b16 %v1499
        %v1547 = vunpack.c.h.b16 %v1499
        %v1548 = vunpack.c.l.b16 %v1500
        %v1549 = vunpack.c.h.b16 %v1500
        %v1550 = vunpack.c.l.b16 %v1501
        %v1551 = vunpack.c.h.b16 %v1501
        %v1552 = vunpack.c.l.b16 %v1502
        %v1553 = vunpack.c.h.b16 %v1502
        %v1554 = vunpack.c.l.b16 %v1503
        %v1555 = vunpack.c.h.b16 %v1503
        %v1556 = vunpack.c.l.b16 %v1504
        %v1557 = vunpack.c.h.b16 %v1504
        %v1558 = vunpack.c.l.b16 %v1505
        %v1559 = vunpack.c.h.b16 %v1505
        %v1560 = vpack.c.b16 %v1530, %v1528
        %v1561 = vpack.c.b16 %v1531, %v1529
        %v1562 = vpack.c.b16 %v1534, %v1532
        %v1563 = vpack.c.b16 %v1535, %v1533
        %v1564 = vpack.c.b16 %v1538, %v1536
        %v1565 = vpack.c.b16 %v1539, %v1537
        %v1566 = vpack.c.b16 %v1542, %v1540
        %v1567 = vpack.c.b16 %v1543, %v1541
        %v1568 = vpack.c.b16 %v1546, %v1544
        %v1569 = vpack.c.b16 %v1547, %v1545
        %v1570 = vpack.c.b16 %v1550, %v1548
        %v1571 = vpack.c.b16 %v1551, %v1549
        %v1572 = vpack.c.b16 %v1554, %v1552
        %v1573 = vpack.c.b16 %v1555, %v1553
        %v1574 = vpack.c.b16 %v1558, %v1556
        %v1575 = vpack.c.b16 %v1559, %v1557
        %1592 = vmatpush.bf16.msra.mxu0 %v1574
        %1593 = vmatpush.bf16.msra.mxu0 %v1572
        %1594 = vmatpush.bf16.msra.mxu0 %v1570
        %1595 = vmatpush.bf16.msra.mxu0 %v1568
        %1596 = vmatpush.bf16.msra.mxu0 %v1566
        %1597 = vmatpush.bf16.msra.mxu0 %v1564
        %1598 = vmatpush.bf16.msra.mxu0 %v1562
        %1599 = vmatpush.bf16.msra.mxu0 %v1560
        %1600 = vmatmul.bf16.gmra.mxu0 %v1486
        %v1601 = vpop.f32.mrf.mxu0
        %v1602 = vadd.f32 %v1508, %v1601
        %v1603 = vpop.f32.mrf.mxu0
        %v1604 = vadd.f32 %v1508, %v1603
        %1605 = vmatmul.bf16.gmra.mxu0 %v1487
        %v1606 = vpop.f32.mrf.mxu0
        %v1607 = vadd.f32 %v1508, %v1606
        %v1608 = vpop.f32.mrf.mxu0
        %v1609 = vadd.f32 %v1508, %v1608
        %1610 = vmatmul.bf16.gmra.mxu0 %v1488
        %v1611 = vpop.f32.mrf.mxu0
        %v1612 = vadd.f32 %v1508, %v1611
        %v1613 = vpop.f32.mrf.mxu0
        %v1614 = vadd.f32 %v1508, %v1613
        %1615 = vmatmul.bf16.gmra.mxu0 %v1489
        %v1616 = vpop.f32.mrf.mxu0
        %v1617 = vadd.f32 %v1508, %v1616
        %v1618 = vpop.f32.mrf.mxu0
        %v1619 = vadd.f32 %v1508, %v1618
        %1620 = vdwg.mxu0
        %1621 = vmatpush.bf16.msra.mxu0 %v1575
        %1622 = vmatpush.bf16.msra.mxu0 %v1573
        %1623 = vmatpush.bf16.msra.mxu0 %v1571
        %1624 = vmatpush.bf16.msra.mxu0 %v1569
        %1625 = vmatpush.bf16.msra.mxu0 %v1567
        %1626 = vmatpush.bf16.msra.mxu0 %v1565
        %1627 = vmatpush.bf16.msra.mxu0 %v1563
        %1628 = vmatpush.bf16.msra.mxu0 %v1561
        %1629 = vmatmul.bf16.gmra.mxu0 %v1486
        %v1630 = vpop.f32.mrf.mxu0
        %v1631 = vadd.f32 %v1509, %v1630
        %v1632 = vpop.f32.mrf.mxu0
        %v1633 = vadd.f32 %v1509, %v1632
        %1634 = vmatmul.bf16.gmra.mxu0 %v1487
        %v1635 = vpop.f32.mrf.mxu0
        %v1636 = vadd.f32 %v1509, %v1635
        %v1637 = vpop.f32.mrf.mxu0
        %v1638 = vadd.f32 %v1509, %v1637
        %1639 = vmatmul.bf16.gmra.mxu0 %v1488
        %v1640 = vpop.f32.mrf.mxu0
        %v1641 = vadd.f32 %v1509, %v1640
        %v1642 = vpop.f32.mrf.mxu0
        %v1643 = vadd.f32 %v1509, %v1642
        %1644 = vmatmul.bf16.gmra.mxu0 %v1489
        %v1645 = vpop.f32.mrf.mxu0
        %v1646 = vadd.f32 %v1509, %v1645
        %v1647 = vpop.f32.mrf.mxu0
        %v1648 = vadd.f32 %v1509, %v1647
        %1649 = vdwg.mxu0
        %v1650 = vxor.u32 %v1602, 2147483648
        %v1651 = vxor.u32 %v1604, 2147483648
        %v1652 = vxor.u32 %v1607, 2147483648
        %v1653 = vxor.u32 %v1609, 2147483648
        %v1654 = vxor.u32 %v1612, 2147483648
        %v1655 = vxor.u32 %v1614, 2147483648
        %v1656 = vxor.u32 %v1617, 2147483648
        %v1657 = vxor.u32 %v1619, 2147483648
        %v1658 = vmul.f32 %v1650, 1.442695
        %v1659 = vpow.pop %v1658
        %v1660 = vmul.f32 %v1651, 1.442695
        %v1661 = vpow.pop %v1660
        %v1662 = vmul.f32 %v1652, 1.442695
        %v1663 = vpow.pop %v1662
        %v1664 = vmul.f32 %v1653, 1.442695
        %v1665 = vpow.pop %v1664
        %v1666 = vmul.f32 %v1654, 1.442695
        %v1667 = vpow.pop %v1666
        %v1668 = vmul.f32 %v1655, 1.442695
        %v1669 = vpow.pop %v1668
        %v1670 = vmul.f32 %v1656, 1.442695
        %v1671 = vpow.pop %v1670
        %v1672 = vmul.f32 %v1657, 1.442695
        %v1673 = vpow.pop %v1672
        %v1674 = vadd.f32 %v1659, 1.0
        %v1675 = vadd.f32 %v1661, 1.0
        %v1676 = vadd.f32 %v1663, 1.0
        %v1677 = vadd.f32 %v1665, 1.0
        %v1678 = vadd.f32 %v1667, 1.0
        %v1679 = vadd.f32 %v1669, 1.0
        %v1680 = vadd.f32 %v1671, 1.0
        %v1681 = vadd.f32 %v1673, 1.0
        %v1682 = vrcp.pop %v1674
        %v1683 = vmul.f32 %v1674, %v1682
        %v1684 = vsub.f32 1.0, %v1683
        %v1685 = vmul.f32 %v1682, %v1684
        %v1686 = vadd.f32 %v1682, %v1685
        %vm1687 = vweird.f32 %v1674
        %vm1688 = vweird.f32 %v1682
        %vm1689 = vmor %vm1687, %vm1688
        %v1690 = vsel %vm1689, %v1682, %v1686
        %v1691 = vand.u32 2147483647, %v1674
        %vm1692 = vcmp.eq.f32.partialorder %v1691, 8.507059e+37
        %v1693 = vand.u32 %v1674, 2147483648
        %v1694 = vor.u32 1.1754944e-38, %v1693
        %v1695 = vsel %vm1692, %v1694, %v1690
        %v1696 = vmul.f32 1.0, %v1695
        %v1697 = vrcp.pop %v1675
        %v1698 = vmul.f32 %v1675, %v1697
        %v1699 = vsub.f32 1.0, %v1698
        %v1700 = vmul.f32 %v1697, %v1699
        %v1701 = vadd.f32 %v1697, %v1700
        %vm1702 = vweird.f32 %v1675
        %vm1703 = vweird.f32 %v1697
        %vm1704 = vmor %vm1702, %vm1703
        %v1705 = vsel %vm1704, %v1697, %v1701
        %v1706 = vand.u32 2147483647, %v1675
        %vm1707 = vcmp.eq.f32.partialorder %v1706, 8.507059e+37
        %v1708 = vand.u32 %v1675, 2147483648
        %v1709 = vor.u32 1.1754944e-38, %v1708
        %v1710 = vsel %vm1707, %v1709, %v1705
        %v1711 = vmul.f32 1.0, %v1710
        %v1712 = vrcp.pop %v1676
        %v1713 = vmul.f32 %v1676, %v1712
        %v1714 = vsub.f32 1.0, %v1713
        %v1715 = vmul.f32 %v1712, %v1714
        %v1716 = vadd.f32 %v1712, %v1715
        %vm1717 = vweird.f32 %v1676
        %vm1718 = vweird.f32 %v1712
        %vm1719 = vmor %vm1717, %vm1718
        %v1720 = vsel %vm1719, %v1712, %v1716
        %v1721 = vand.u32 2147483647, %v1676
        %vm1722 = vcmp.eq.f32.partialorder %v1721, 8.507059e+37
        %v1723 = vand.u32 %v1676, 2147483648
        %v1724 = vor.u32 1.1754944e-38, %v1723
        %v1725 = vsel %vm1722, %v1724, %v1720
        %v1726 = vmul.f32 1.0, %v1725
        %v1727 = vrcp.pop %v1677
        %v1728 = vmul.f32 %v1677, %v1727
        %v1729 = vsub.f32 1.0, %v1728
        %v1730 = vmul.f32 %v1727, %v1729
        %v1731 = vadd.f32 %v1727, %v1730
        %vm1732 = vweird.f32 %v1677
        %vm1733 = vweird.f32 %v1727
        %vm1734 = vmor %vm1732, %vm1733
        %v1735 = vsel %vm1734, %v1727, %v1731
        %v1736 = vand.u32 2147483647, %v1677
        %vm1737 = vcmp.eq.f32.partialorder %v1736, 8.507059e+37
        %v1738 = vand.u32 %v1677, 2147483648
        %v1739 = vor.u32 1.1754944e-38, %v1738
        %v1740 = vsel %vm1737, %v1739, %v1735
        %v1741 = vmul.f32 1.0, %v1740
        %v1742 = vrcp.pop %v1678
        %v1743 = vmul.f32 %v1678, %v1742
        %v1744 = vsub.f32 1.0, %v1743
        %v1745 = vmul.f32 %v1742, %v1744
        %v1746 = vadd.f32 %v1742, %v1745
        %vm1747 = vweird.f32 %v1678
        %vm1748 = vweird.f32 %v1742
        %vm1749 = vmor %vm1747, %vm1748
        %v1750 = vsel %vm1749, %v1742, %v1746
        %v1751 = vand.u32 2147483647, %v1678
        %vm1752 = vcmp.eq.f32.partialorder %v1751, 8.507059e+37
        %v1753 = vand.u32 %v1678, 2147483648
        %v1754 = vor.u32 1.1754944e-38, %v1753
        %v1755 = vsel %vm1752, %v1754, %v1750
        %v1756 = vmul.f32 1.0, %v1755
        %v1757 = vrcp.pop %v1679
        %v1758 = vmul.f32 %v1679, %v1757
        %v1759 = vsub.f32 1.0, %v1758
        %v1760 = vmul.f32 %v1757, %v1759
        %v1761 = vadd.f32 %v1757, %v1760
        %vm1762 = vweird.f32 %v1679
        %vm1763 = vweird.f32 %v1757
        %vm1764 = vmor %vm1762, %vm1763
        %v1765 = vsel %vm1764, %v1757, %v1761
        %v1766 = vand.u32 2147483647, %v1679
        %vm1767 = vcmp.eq.f32.partialorder %v1766, 8.507059e+37
        %v1768 = vand.u32 %v1679, 2147483648
        %v1769 = vor.u32 1.1754944e-38, %v1768
        %v1770 = vsel %vm1767, %v1769, %v1765
        %v1771 = vmul.f32 1.0, %v1770
        %v1772 = vrcp.pop %v1680
        %v1773 = vmul.f32 %v1680, %v1772
        %v1774 = vsub.f32 1.0, %v1773
        %v1775 = vmul.f32 %v1772, %v1774
        %v1776 = vadd.f32 %v1772, %v1775
        %vm1777 = vweird.f32 %v1680
        %vm1778 = vweird.f32 %v1772
        %vm1779 = vmor %vm1777, %vm1778
        %v1780 = vsel %vm1779, %v1772, %v1776
        %v1781 = vand.u32 2147483647, %v1680
        %vm1782 = vcmp.eq.f32.partialorder %v1781, 8.507059e+37
        %v1783 = vand.u32 %v1680, 2147483648
        %v1784 = vor.u32 1.1754944e-38, %v1783
        %v1785 = vsel %vm1782, %v1784, %v1780
        %v1786 = vmul.f32 1.0, %v1785
        %v1787 = vrcp.pop %v1681
        %v1788 = vmul.f32 %v1681, %v1787
        %v1789 = vsub.f32 1.0, %v1788
        %v1790 = vmul.f32 %v1787, %v1789
        %v1791 = vadd.f32 %v1787, %v1790
        %vm1792 = vweird.f32 %v1681
        %vm1793 = vweird.f32 %v1787
        %vm1794 = vmor %vm1792, %vm1793
        %v1795 = vsel %vm1794, %v1787, %v1791
        %v1796 = vand.u32 2147483647, %v1681
        %vm1797 = vcmp.eq.f32.partialorder %v1796, 8.507059e+37
        %v1798 = vand.u32 %v1681, 2147483648
        %v1799 = vor.u32 1.1754944e-38, %v1798
        %v1800 = vsel %vm1797, %v1799, %v1795
        %v1801 = vmul.f32 1.0, %v1800
        %v1802 = vmul.f32 %v1602, %v1696
        %v1803 = vmul.f32 %v1604, %v1711
        %v1804 = vmul.f32 %v1607, %v1726
        %v1805 = vmul.f32 %v1609, %v1741
        %v1806 = vmul.f32 %v1612, %v1756
        %v1807 = vmul.f32 %v1614, %v1771
        %v1808 = vmul.f32 %v1617, %v1786
        %v1809 = vmul.f32 %v1619, %v1801
        %v1810 = vmul.f32 %v1802, %v1631
        %v1811 = vmul.f32 %v1803, %v1633
        %v1812 = vmul.f32 %v1804, %v1636
        %v1813 = vmul.f32 %v1805, %v1638
        %v1814 = vmul.f32 %v1806, %v1641
        %v1815 = vmul.f32 %v1807, %v1643
        %v1816 = vmul.f32 %v1808, %v1646
        %v1817 = vmul.f32 %v1809, %v1648
        %v1818 = vpack.c.bf16 %v1811, %v1810
        %v1819 = vpack.c.bf16 %v1813, %v1812
        %v1820 = vpack.c.bf16 %v1815, %v1814
        %v1821 = vpack.c.bf16 %v1817, %v1816
        %v1822 = vld [vmem:[#allocation15] sm:$0xf]
        %v1823 = vld [vmem:[#allocation15 + $0x4] sm:$0xf]
        %v1824 = vld [vmem:[#allocation15 + $0x8] sm:$0xf]
        %v1825 = vld [vmem:[#allocation15 + $0xc] sm:$0xf]
        %v1826 = vld [vmem:[#allocation15 + $0x10] sm:$0xf]
        %v1827 = vld [vmem:[#allocation15 + $0x14] sm:$0xf]
        %v1828 = vld [vmem:[#allocation15 + $0x18] sm:$0xf]
        %v1829 = vld [vmem:[#allocation15 + $0x1c] sm:$0xf]
        %v1830 = vld [vmem:[#allocation15 + $0x20] sm:$0xf]
        %v1831 = vld [vmem:[#allocation15 + $0x24] sm:$0xf]
        %v1832 = vld [vmem:[#allocation15 + $0x28] sm:$0xf]
        %v1833 = vld [vmem:[#allocation15 + $0x2c] sm:$0xf]
        %v1834 = vld [vmem:[#allocation15 + $0x30] sm:$0xf]
        %v1835 = vld [vmem:[#allocation15 + $0x34] sm:$0xf]
        %v1836 = vld [vmem:[#allocation15 + $0x38] sm:$0xf]
        %v1837 = vld [vmem:[#allocation15 + $0x3c] sm:$0xf]
        %v1838 = vperm.slane %v1333, 0
        %v1855 = vunpack.c.l.b16 %v1822
        %v1856 = vunpack.c.l.b16 %v1823
        %v1857 = vunpack.c.l.b16 %v1824
        %v1858 = vunpack.c.l.b16 %v1825
        %v1859 = vunpack.c.l.b16 %v1826
        %v1860 = vunpack.c.l.b16 %v1827
        %v1861 = vunpack.c.l.b16 %v1828
        %v1862 = vunpack.c.l.b16 %v1829
        %v1863 = vunpack.c.l.b16 %v1830
        %v1864 = vunpack.c.l.b16 %v1831
        %v1865 = vunpack.c.l.b16 %v1832
        %v1866 = vunpack.c.l.b16 %v1833
        %v1867 = vunpack.c.l.b16 %v1834
        %v1868 = vunpack.c.l.b16 %v1835
        %v1869 = vunpack.c.l.b16 %v1836
        %v1870 = vunpack.c.l.b16 %v1837
        %v1871 = vpack.c.b16 %v1856, %v1855
        %v1872 = vpack.c.b16 %v1858, %v1857
        %v1873 = vpack.c.b16 %v1860, %v1859
        %v1874 = vpack.c.b16 %v1862, %v1861
        %v1875 = vpack.c.b16 %v1864, %v1863
        %v1876 = vpack.c.b16 %v1866, %v1865
        %v1877 = vpack.c.b16 %v1868, %v1867
        %v1878 = vpack.c.b16 %v1870, %v1869
        %1887 = vmatpush.bf16.msra.mxu0 %v1878
        %1888 = vmatpush.bf16.msra.mxu0 %v1877
        %1889 = vmatpush.bf16.msra.mxu0 %v1876
        %1890 = vmatpush.bf16.msra.mxu0 %v1875
        %1891 = vmatpush.bf16.msra.mxu0 %v1874
        %1892 = vmatpush.bf16.msra.mxu0 %v1873
        %1893 = vmatpush.bf16.msra.mxu0 %v1872
        %1894 = vmatpush.bf16.msra.mxu0 %v1871
        %1895 = vmatmul.bf16.gmra.mxu0 %v1818
        %v1896 = vpop.f32.mrf.mxu0
        %v1897 = vadd.f32 %v1838, %v1896
        %v1898 = vpop.f32.mrf.mxu0
        %v1899 = vadd.f32 %v1838, %v1898
        %1900 = vmatmul.bf16.gmra.mxu0 %v1819
        %v1901 = vpop.f32.mrf.mxu0
        %v1902 = vadd.f32 %v1838, %v1901
        %v1903 = vpop.f32.mrf.mxu0
        %v1904 = vadd.f32 %v1838, %v1903
        %1905 = vmatmul.bf16.gmra.mxu0 %v1820
        %v1906 = vpop.f32.mrf.mxu0
        %v1907 = vadd.f32 %v1838, %v1906
        %v1908 = vpop.f32.mrf.mxu0
        %v1909 = vadd.f32 %v1838, %v1908
        %1910 = vmatmul.bf16.gmra.mxu0 %v1821
        %v1911 = vpop.f32.mrf.mxu0
        %v1912 = vadd.f32 %v1838, %v1911
        %v1913 = vpop.f32.mrf.mxu0
        %v1914 = vadd.f32 %v1838, %v1913
        %1915 = vdwg.mxu0
        %v1916 = vmul.f32 %v1897, %v1897
        %v1917 = vmul.f32 %v1899, %v1899
        %v1918 = vmul.f32 %v1902, %v1902
        %v1919 = vmul.f32 %v1904, %v1904
        %v1920 = vmul.f32 %v1907, %v1907
        %v1921 = vmul.f32 %v1909, %v1909
        %v1922 = vmul.f32 %v1912, %v1912
        %v1923 = vmul.f32 %v1914, %v1914
        %1924 = vadd.xlane.f32.xlu0 %v1916
        %v1925 = vpop.xlane.xlu0 %1924
        %1926 = vadd.xlane.f32.xlu0 %v1917
        %v1927 = vpop.xlane.xlu0 %1926
        %1928 = vadd.xlane.f32.xlu0 %v1918
        %v1929 = vpop.xlane.xlu0 %1928
        %1930 = vadd.xlane.f32.xlu0 %v1919
        %v1931 = vpop.xlane.xlu0 %1930
        %1932 = vadd.xlane.f32.xlu0 %v1920
        %v1933 = vpop.xlane.xlu0 %1932
        %1934 = vadd.xlane.f32.xlu0 %v1921
        %v1935 = vpop.xlane.xlu0 %1934
        %1936 = vadd.xlane.f32.xlu0 %v1922
        %v1937 = vpop.xlane.xlu0 %1936
        %1938 = vadd.xlane.f32.xlu0 %v1923
        %v1939 = vpop.xlane.xlu0 %1938
        %v1940 = vmul.f32 %v1925, %v1364
        %v1941 = vmul.f32 %v1927, %v1364
        %v1942 = vmul.f32 %v1929, %v1364
        %v1943 = vmul.f32 %v1931, %v1364
        %v1944 = vmul.f32 %v1933, %v1364
        %v1945 = vmul.f32 %v1935, %v1364
        %v1946 = vmul.f32 %v1937, %v1364
        %v1947 = vmul.f32 %v1939, %v1364
        %v1948 = vadd.f32 %v1940, 1e-06
        %v1949 = vadd.f32 %v1941, 1e-06
        %v1950 = vadd.f32 %v1942, 1e-06
        %v1951 = vadd.f32 %v1943, 1e-06
        %v1952 = vadd.f32 %v1944, 1e-06
        %v1953 = vadd.f32 %v1945, 1e-06
        %v1954 = vadd.f32 %v1946, 1e-06
        %v1955 = vadd.f32 %v1947, 1e-06
        %v1956 = vrsqrt.pop %v1948
        %v1957 = vmul.f32 %v1956, %v1948
        %v1958 = vmul.f32 %v1957, %v1956
        %v1959 = vmul.f32 0.5, %v1958
        %v1960 = vsub.f32 1.5, %v1959
        %v1961 = vmul.f32 %v1956, %v1960
        %vm1962 = vweird.f32 %v1948
        %vm1963 = vweird.f32 %v1956
        %vm1964 = vmor %vm1962, %vm1963
        %v1965 = vsel %vm1964, %v1956, %v1961
        %v1966 = vrsqrt.pop %v1949
        %v1967 = vmul.f32 %v1966, %v1949
        %v1968 = vmul.f32 %v1967, %v1966
        %v1969 = vmul.f32 0.5, %v1968
        %v1970 = vsub.f32 1.5, %v1969
        %v1971 = vmul.f32 %v1966, %v1970
        %vm1972 = vweird.f32 %v1949
        %vm1973 = vweird.f32 %v1966
        %vm1974 = vmor %vm1972, %vm1973
        %v1975 = vsel %vm1974, %v1966, %v1971
        %v1976 = vrsqrt.pop %v1950
        %v1977 = vmul.f32 %v1976, %v1950
        %v1978 = vmul.f32 %v1977, %v1976
        %v1979 = vmul.f32 0.5, %v1978
        %v1980 = vsub.f32 1.5, %v1979
        %v1981 = vmul.f32 %v1976, %v1980
        %vm1982 = vweird.f32 %v1950
        %vm1983 = vweird.f32 %v1976
        %vm1984 = vmor %vm1982, %vm1983
        %v1985 = vsel %vm1984, %v1976, %v1981
        %v1986 = vrsqrt.pop %v1951
        %v1987 = vmul.f32 %v1986, %v1951
        %v1988 = vmul.f32 %v1987, %v1986
        %v1989 = vmul.f32 0.5, %v1988
        %v1990 = vsub.f32 1.5, %v1989
        %v1991 = vmul.f32 %v1986, %v1990
        %vm1992 = vweird.f32 %v1951
        %vm1993 = vweird.f32 %v1986
        %vm1994 = vmor %vm1992, %vm1993
        %v1995 = vsel %vm1994, %v1986, %v1991
        %v1996 = vrsqrt.pop %v1952
        %v1997 = vmul.f32 %v1996, %v1952
        %v1998 = vmul.f32 %v1997, %v1996
        %v1999 = vmul.f32 0.5, %v1998
        %v2000 = vsub.f32 1.5, %v1999
        %v2001 = vmul.f32 %v1996, %v2000
        %vm2002 = vweird.f32 %v1952
        %vm2003 = vweird.f32 %v1996
        %vm2004 = vmor %vm2002, %vm2003
        %v2005 = vsel %vm2004, %v1996, %v2001
        %v2006 = vrsqrt.pop %v1953
        %v2007 = vmul.f32 %v2006, %v1953
        %v2008 = vmul.f32 %v2007, %v2006
        %v2009 = vmul.f32 0.5, %v2008
        %v2010 = vsub.f32 1.5, %v2009
        %v2011 = vmul.f32 %v2006, %v2010
        %vm2012 = vweird.f32 %v1953
        %vm2013 = vweird.f32 %v2006
        %vm2014 = vmor %vm2012, %vm2013
        %v2015 = vsel %vm2014, %v2006, %v2011
        %v2016 = vrsqrt.pop %v1954
        %v2017 = vmul.f32 %v2016, %v1954
        %v2018 = vmul.f32 %v2017, %v2016
        %v2019 = vmul.f32 0.5, %v2018
        %v2020 = vsub.f32 1.5, %v2019
        %v2021 = vmul.f32 %v2016, %v2020
        %vm2022 = vweird.f32 %v1954
        %vm2023 = vweird.f32 %v2016
        %vm2024 = vmor %vm2022, %vm2023
        %v2025 = vsel %vm2024, %v2016, %v2021
        %v2026 = vrsqrt.pop %v1955
        %v2027 = vmul.f32 %v2026, %v1955
        %v2028 = vmul.f32 %v2027, %v2026
        %v2029 = vmul.f32 0.5, %v2028
        %v2030 = vsub.f32 1.5, %v2029
        %v2031 = vmul.f32 %v2026, %v2030
        %vm2032 = vweird.f32 %v1955
        %vm2033 = vweird.f32 %v2026
        %vm2034 = vmor %vm2032, %vm2033
        %v2035 = vsel %vm2034, %v2026, %v2031
        %v2036 = vmul.f32 %v1897, %v1965
        %v2037 = vmul.f32 %v1899, %v1975
        %v2038 = vmul.f32 %v1902, %v1985
        %v2039 = vmul.f32 %v1904, %v1995
        %v2040 = vmul.f32 %v1907, %v2005
        %v2041 = vmul.f32 %v1909, %v2015
        %v2042 = vmul.f32 %v1912, %v2025
        %v2043 = vmul.f32 %v1914, %v2035
        %v2044 = vperm.slane %v1332, 0
        %v2045 = vmul.f32 %v2036, %v2044
        %v2046 = vmul.f32 %v2037, %v2044
        %v2047 = vmul.f32 %v2038, %v2044
        %v2048 = vmul.f32 %v2039, %v2044
        %v2049 = vmul.f32 %v2040, %v2044
        %v2050 = vmul.f32 %v2041, %v2044
        %v2051 = vmul.f32 %v2042, %v2044
        %v2052 = vmul.f32 %v2043, %v2044
        %v2053 = vadd.f32 %v2045, %v1478
        %v2054 = vadd.f32 %v2046, %v1479
        %v2055 = vadd.f32 %v2047, %v1480
        %v2056 = vadd.f32 %v2048, %v1481
        %v2057 = vadd.f32 %v2049, %v1482
        %v2058 = vadd.f32 %v2050, %v1483
        %v2059 = vadd.f32 %v2051, %v1484
        %v2060 = vadd.f32 %v2052, %v1485
        %2061 = vst [vmem:[%s494] sm:$0xff] %v2053
        %2062 = vst [vmem:[%s494 + $0x8] sm:$0xff] %v2054
        %2063 = vst [vmem:[%s494 + $0x10] sm:$0xff] %v2055
        %2064 = vst [vmem:[%s494 + $0x18] sm:$0xff] %v2056
        %2065 = vst [vmem:[%s494 + $0x20] sm:$0xff] %v2057
        %2066 = vst [vmem:[%s494 + $0x28] sm:$0xff] %v2058
        %2067 = vst [vmem:[%s494 + $0x30] sm:$0xff] %v2059
        %2068 = vst [vmem:[%s494 + $0x38] sm:$0xff] %v2060
        %s2069 = sand.u32 %s254, 1
        %s2070 = scalar_lea.sflag [#allocation6], %s2069
        %s2071 = sand.u32 %s254, 1
        %s2072 = smul.addr %s2071, 64
        %s2073 = scalar_lea.vmem [#allocation16], %s2072
        // Predicated region
        $region89: #{tpu_custom_call.1} parent=55 // pred_check
          %p2074 = pneg %p264
        $region90: #{tpu_custom_call.1} parent=55 // pred_check_branch
          %2076 = sbr.rel (%p2074) target = $region92
        $region91: #{tpu_custom_call.1} parent=55 // pred_region
          %s2077 = smul.u32 8, %s36
          %2079 = vsyncadd %s2070, 0
          %s2080 = smul.addr %s35, 8
          %s2081 = sadd.s32 %s2077, %s2080
          %s2082 = smul.addr %s2081, 8
          %s2083 = scalar_lea.hbm %s9, %s2082
          %s2084 = sshll.u32 %s2073, 4
          %s2085 = int_to_ptr.vmem [resolvable:$true] %s2084
          %s2086 = sshll.u32 %s2083, 4
          %s2087 = int_to_ptr.hbm [resolvable:$true] %s2086
          %2092 = dma.vmem_to_hbm [thread:$0]  %s2085, 1024, %s2087, %s2070, 128, 128, 8
        $region92: #{tpu_custom_call.1} parent=55 // pred_fallthru
          _
      $region56: #{tpu_custom_call.1} parent=5 // pred_fallthru
        _
      %p2093 = scmp.le.s32.totalorder 2, %s26
      // Predicated region
      $region93: #{tpu_custom_call.1} parent=5 // pred_check
        %p2094 = pneg %p2093
      $region94: #{tpu_custom_call.1} parent=5 // pred_check_branch
        %2096 = sbr.rel (%p2094) target = $region96
      $region95: #{tpu_custom_call.1} parent=5 // pred_region
        %s2097 = ssub.s32 %s26, 2
        // Predicated region
        $region97: #{tpu_custom_call.1} parent=95 // pred_check
          %p2098 = pneg %p270
        $region98: #{tpu_custom_call.1} parent=95 // pred_check_branch
          %2100 = sbr.rel (%p2098) target = $region100
        $region99: #{tpu_custom_call.1} parent=95 // pred_region
          %s2101 = sand.u32 %s255, 1
          %s2102 = scalar_lea.sflag [#allocation6], %s2101
          %s2103 = sand.u32 %s255, 1
          %s2104 = smul.addr %s2103, 64
          %s2105 = scalar_lea.vmem [#allocation16], %s2104
          %2107 = dma.done %s2102, 1024
        $region100: #{tpu_custom_call.1} parent=95 // pred_fallthru
          _
      $region96: #{tpu_custom_call.1} parent=5 // pred_fallthru
        _
    $region6: #{tpu_custom_call.1} parent=1 // loop_footer
      %s30 = sadd.s32 1, %s26
    $region7: #{tpu_custom_call.1} parent=1 // loop_footer_branch
      %25 = sbr.rel target = $region3
    $region8: #{tpu_custom_call.1} parent=1 // loop_exit
      _
    %2108 = vsyncpa [#allocation5], 1
    %s2109 = scalar_lea.sflag [#allocation5], 1
    %2110 = vsyncpa %s2109, 1
    %2111 = vsyncpa [#allocation8], 1
    %s2112 = scalar_lea.sflag [#allocation8], 1
    %2113 = vsyncpa %s2112, 1
    %2114 = vsyncpa [#allocation11], 1
    %2115 = vsyncpa [#allocation14], 1
    %2116 = vsyncpa [#allocation6], 1
    %s2117 = scalar_lea.sflag [#allocation6], 1
    %2118 = vsyncpa %s2117, 1

</llo_original>
